<compile_context>
chip_gen: v7x
topology: tpu7x:2x2x1
jax: 0.10.0
libtpu: 0.0.40
codegen_flags: <defaults>
</compile_context>

<pallas_src>
import functools

import jax
import jax.numpy as jnp
from jax.experimental import pallas as pl
from jax.experimental.pallas import tpu as pltpu

BN_EPS = 1e-5
H_PAD = 128                # TPU lane width; hidden/output feature axes pad to this
FOLD_FIRST_MAX_D = 1024    # fold the input BN into Linear1 only when d <= this


def _round_up(n, m):
    return ((n + m - 1) // m) * m


def _pad2d(a, rows, cols):
    a = jnp.asarray(a, jnp.float32)
    return jnp.pad(a, ((0, rows - a.shape[0]), (0, cols - a.shape[1])))


# ---------------------------------------------------------------------------
# Kernel (gridless, whole batch resident in VMEM)
# ---------------------------------------------------------------------------
def nn_kernel(x_ref, w1_ref, v0_ref, wh_ref, vh_ref, o_ref, *,
              layers, fold_first):
    """Fused forward pass.

    x_ref  : [N, d]                 flattened input (no padding)
    w1_ref : [d, 128]               first Linear weight, cols zero-padded
    v0_ref : [8, d]                 rows 0/1 = BN0 gamma/beta
    wh_ref : [(layers+1)*128, 128]  hidden Linear weights + output Linear weight
    vh_ref : [R, 128]               row 0 = b1; then per linear j: gamma, beta, bias
    o_ref  : [N, 128]               lane-dense output; only [:, :output_dim] meaningful
    """
    n, _ = x_ref.shape
    inv_n = 1.0 / n
    ones_n = jnp.ones((1, n), jnp.float32)          # reused by every BN

    def col_stats(h):
        # Batch mean / mean-of-squares as two skinny MXU matmuls (frees VPU/XLU).
        mu = jnp.dot(ones_n, h, preferred_element_type=jnp.float32) * inv_n
        ex2 = jnp.dot(ones_n, h * h, preferred_element_type=jnp.float32) * inv_n
        return mu, ex2

    def bn_affine(h, gamma, beta):
        # Training-mode BatchNorm1d folded to per-feature scale/shift ([1, w] rows).
        mu, ex2 = col_stats(h)
        var = jnp.maximum(ex2 - mu * mu, 0.0)       # clamp single-pass variance
        scale = jax.lax.rsqrt(var + BN_EPS) * gamma
        shift = beta - mu * scale
        return scale, shift

    def row_to_col(row):
        # [1, w] -> [w, 1] without relying on vector-transpose lowering:
        # materialize diag(row) via 2-D iota masks and reduce along lanes.
        w = row.shape[1]
        r_ids = jax.lax.broadcasted_iota(jnp.int32, (w, w), 0)
        c_ids = jax.lax.broadcasted_iota(jnp.int32, (w, w), 1)
        diag = jnp.where(r_ids == c_ids, jnp.broadcast_to(row, (w, w)), 0.0)
        return jnp.sum(diag, axis=1, keepdims=True)

    def bn_linear(h, gamma, beta, w, b):
        # BN folded into the following Linear:
        #   (h*scale + shift) @ W + b == h @ (scale_col * W) + (shift @ W + b)
        scale, shift = bn_affine(h, gamma, beta)
        w_eff = row_to_col(scale) * w                                        # [w_in, w_out]
        b_eff = jnp.dot(shift, w, preferred_element_type=jnp.float32) + b    # [1, w_out]
        return jnp.dot(h, w_eff, preferred_element_type=jnp.float32) + b_eff

    x = x_ref[...]                                  # [N, d]

    # --- BatchNorm1d(input_dim) folded into Linear(input_dim, hidden), Tanh ---
    g0 = v0_ref[0:1, :]
    be0 = v0_ref[1:2, :]
    b1 = vh_ref[0:1, :]
    if fold_first:
        h = bn_linear(x, g0, be0, w1_ref[...], b1)
    else:
        # Very wide inputs: apply the BN affine on x directly (avoid [d, d] diag temp).
        scale, shift = bn_affine(x, g0, be0)
        h = jnp.dot(x * scale + shift, w1_ref[...],
                    preferred_element_type=jnp.float32) + b1
    h = jnp.tanh(h)                                 # [N, 128]

    # --- hidden stack + output Linear; every BN folded into the next Linear ---
    # Module order: ... Tanh -> (Dropout) -> BN -> Linear ...
    # TODO(synk): Dropout(p=1e-10) treated as identity (no per-element RNG mask).
    for j in range(layers + 1):                     # j == layers is the output Linear
        g = vh_ref[1 + 3 * j:2 + 3 * j, :]
        be = vh_ref[2 + 3 * j:3 + 3 * j, :]
        b = vh_ref[3 + 3 * j:4 + 3 * j, :]
        w = wh_ref[j * H_PAD:(j + 1) * H_PAD, :]
        h = bn_linear(h, g, be, w, b)
        if j < layers:
            h = jnp.tanh(h)

    o_ref[...] = h                                  # lane-dense [N, 128] store


# ---------------------------------------------------------------------------
# Wrapper (parameter packing is trace-time glue on tiny arrays)
# ---------------------------------------------------------------------------
def nn_forward(x, params):
    n = x.shape[0]
    x2d = x.reshape(n, -1)                          # nn.Flatten()
    if x2d.dtype != jnp.float32:
        x2d = x2d.astype(jnp.float32)
    d = x2d.shape[1]

    hidden = params["w1"].shape[1]
    layers = params["wh"].shape[0]
    output_dim = params["wo"].shape[1]
    assert hidden <= H_PAD and output_dim <= H_PAD, "hidden/output_dim must be <= 128"

    # First Linear weight, lane-padded columns only.
    w1 = _pad2d(params["w1"], d, H_PAD)             # [d, 128]

    # d-wide BN vectors (gamma0, beta0), sublane-aligned.
    v0 = jnp.concatenate(
        [jnp.asarray(params["g0"], jnp.float32).reshape(1, d),
         jnp.asarray(params["be0"], jnp.float32).reshape(1, d)], axis=0)
    v0 = jnp.pad(v0, ((0, _round_up(v0.shape[0], 8) - v0.shape[0]), (0, 0)))

    # Hidden + output Linear weights, row-concatenated, each padded to [128, 128].
    wh_rows = [_pad2d(params["wh"][k], H_PAD, H_PAD) for k in range(layers)]
    wh_rows.append(_pad2d(params["wo"], H_PAD, H_PAD))
    wh_slab = jnp.concatenate(wh_rows, axis=0)      # [(L+1)*128, 128]

    # Hidden-width vectors, lane-padded to 128: b1, then per linear j (gamma, beta, bias).
    def hrow(v):
        v = jnp.asarray(v, jnp.float32).reshape(1, -1)
        return jnp.pad(v, ((0, 0), (0, H_PAD - v.shape[1])))

    vh_rows = [hrow(params["b1"])]
    for j in range(layers + 1):
        if j == 0:
            g, be = params["g1"], params["be1"]
        else:
            g, be = params["gh"][j - 1], params["beh"][j - 1]
        b = params["bh"][j] if j < layers else params["bo"]
        vh_rows += [hrow(g), hrow(be), hrow(b)]
    vh_slab = jnp.concatenate(vh_rows, axis=0)
    vh_slab = jnp.pad(vh_slab, ((0, _round_up(vh_slab.shape[0], 8) - vh_slab.shape[0]),
                                (0, 0)))

    fold_first = d <= FOLD_FIRST_MAX_D

    # Advisory cost estimate for XLA scheduling around the custom call.
    matmul_flops = 2 * n * (d * H_PAD + (layers + 1) * H_PAD * H_PAD)
    stat_flops = 4 * n * (d + (layers + 1) * H_PAD)          # ones@h and ones@(h*h)
    flops = int(matmul_flops + stat_flops)
    transcendentals = int(n * H_PAD * (layers + 1) + (layers + 2) * H_PAD)
    bytes_accessed = int(4 * (x2d.size + w1.size + v0.size + wh_slab.size
                              + vh_slab.size + n * H_PAD))

    # Whole-batch-resident footprint -> VMEM budget (capped at 75% of physical VMEM).
    footprint = 4 * (2 * n * d + 4 * n * H_PAD
                     + w1.size + v0.size + wh_slab.size + vh_slab.size
                     + 3 * max(d if fold_first else 0, H_PAD) ** 2)
    try:
        phys_vmem = pltpu.get_tpu_info().vmem_capacity_bytes
    except Exception:
        phys_vmem = 64 * 1024 * 1024                         # v7x lower bound
    vmem_limit = int(min(max(2 * footprint, 32 * 1024 * 1024),
                         int(phys_vmem * 0.75)))

    vmem = pl.BlockSpec(memory_space=pltpu.MemorySpace.VMEM)
    out = pl.pallas_call(
        functools.partial(nn_kernel, layers=layers, fold_first=fold_first),
        out_shape=jax.ShapeDtypeStruct((n, H_PAD), jnp.float32),
        in_specs=[vmem] * 5,
        out_specs=vmem,
        compiler_params=pltpu.CompilerParams(vmem_limit_bytes=vmem_limit),
        cost_estimate=pl.CostEstimate(flops=flops,
                                      transcendentals=transcendentals,
                                      bytes_accessed=bytes_accessed),
    )(x2d, w1, v0, wh_slab, vh_slab)

    return out[:, :output_dim]


# ---------------------------------------------------------------------------
# Params (PyTorch-style init; Linear weights stored pre-transposed as [in, out])
# ---------------------------------------------------------------------------
def init_params(key, input_dim, hidden=32, layers=3, output_dim=3):
    ks = jax.random.split(key, 2 + layers)
    it = iter(range(len(ks)))

    def lin(k, fan_in, fan_out):
        bound = 1.0 / jnp.sqrt(fan_in)
        kw, kb = jax.random.split(k)
        w = jax.random.uniform(kw, (fan_in, fan_out), jnp.float32, -bound, bound)
        b = jax.random.uniform(kb, (1, fan_out), jnp.float32, -bound, bound)
        return w, b

    p = {}
    p["g0"] = jnp.ones((1, input_dim), jnp.float32)
    p["be0"] = jnp.zeros((1, input_dim), jnp.float32)
    p["w1"], p["b1"] = lin(ks[next(it)], input_dim, hidden)
    p["g1"] = jnp.ones((1, hidden), jnp.float32)
    p["be1"] = jnp.zeros((1, hidden), jnp.float32)
    whs, bhs = [], []
    for _ in range(layers):
        w, b = lin(ks[next(it)], hidden, hidden)
        whs.append(w)
        bhs.append(b)
    p["wh"] = jnp.stack(whs)                        # [L, H, H]
    p["bh"] = jnp.stack(bhs)                        # [L, 1, H]
    p["gh"] = jnp.ones((layers, 1, hidden), jnp.float32)
    p["beh"] = jnp.zeros((layers, 1, hidden), jnp.float32)
    p["wo"], p["bo"] = lin(ks[next(it)], hidden, output_dim)
    return p


# ---------------------------------------------------------------------------
# Pure-JAX reference (two-pass BN) for validation
# ---------------------------------------------------------------------------
def _batchnorm_ref(h, gamma, beta):
    mu = jnp.mean(h, axis=0, keepdims=True)
    var = jnp.mean((h - mu) * (h - mu), axis=0, keepdims=True)
    return (h - mu) * jax.lax.rsqrt(var + BN_EPS) * gamma + beta


def nn_reference(x, params):
    layers = params["wh"].shape[0]
    h = x.reshape(x.shape[0], -1).astype(jnp.float32)
    h = _batchnorm_ref(h, params["g0"], params["be0"])
    h = jnp.tanh(h @ params["w1"] + params["b1"])
    h = _batchnorm_ref(h, params["g1"], params["be1"])
    for k in range(layers):
        h = jnp.tanh(h @ params["wh"][k] + params["bh"][k])
        h = _batchnorm_ref(h, params["gh"][k], params["beh"][k])
    return h @ params["wo"] + params["bo"]


if __name__ == "__main__":
    key = jax.random.PRNGKey(0)
    kx, kp = jax.random.split(key)

    # Small shapes consistent with the module: x [8,4,4,4] -> Flatten -> [8,64]
    batch, c, hs, ws = 8, 4, 4, 4
    input_dim = c * hs * ws
    hidden, layers, output_dim = 32, 3, 3

    x = jax.random.normal(kx, (batch, c, hs, ws), jnp.float32)
    params = init_params(kp, input_dim, hidden=hidden, layers=layers,
                         output_dim=output_dim)

    fwd = jax.jit(nn_forward)                       # params pack folds under jit
    out = jax.block_until_ready(fwd(x, params))
    ref = nn_reference(x, params)

    assert out.shape == (batch, output_dim)
    assert jnp.allclose(out, ref, atol=2e-4, rtol=2e-4), "mismatch vs reference"

    print("KERNEL_OK")
</pallas_src>

<mosaic_0001>
module attributes {stable_mosaic.version = 11 : i64} {
  func.func @nn_kernel(%arg0: memref<8x64xf32, #tpu.memory_space<vmem>>, %arg1: memref<64x128xf32, #tpu.memory_space<vmem>>, %arg2: memref<8x64xf32, #tpu.memory_space<vmem>>, %arg3: memref<512x128xf32, #tpu.memory_space<vmem>>, %arg4: memref<16x128xf32, #tpu.memory_space<vmem>>, %arg5: memref<8x128xf32, #tpu.memory_space<vmem>>) attributes {dimension_semantics = [], scalar_prefetch = 0 : i64, scratch_operands = 0 : i64, tpu.core_type = #tpu.core_type<tc>} {
    %cst = arith.constant 1.000000e+00 : f32
    %0 = vector.broadcast %cst : f32 to vector<1x8xf32>
    %c0 = arith.constant 0 : index
    %c0_0 = arith.constant 0 : index
    %1 = vector.load %arg0[%c0, %c0_0] : memref<8x64xf32, #tpu.memory_space<vmem>>, vector<8x64xf32>
    %c0_1 = arith.constant 0 : index
    %c0_2 = arith.constant 0 : index
    %2 = vector.load %arg2[%c0_1, %c0_2] : memref<8x64xf32, #tpu.memory_space<vmem>>, vector<1x64xf32>
    %c1 = arith.constant 1 : index
    %c0_3 = arith.constant 0 : index
    %3 = vector.load %arg2[%c1, %c0_3] : memref<8x64xf32, #tpu.memory_space<vmem>>, vector<1x64xf32>
    %c0_4 = arith.constant 0 : index
    %c0_5 = arith.constant 0 : index
    %4 = vector.load %arg4[%c0_4, %c0_5] : memref<16x128xf32, #tpu.memory_space<vmem>>, vector<1x128xf32>
    %c0_6 = arith.constant 0 : index
    %c0_7 = arith.constant 0 : index
    %5 = vector.load %arg1[%c0_6, %c0_7] : memref<64x128xf32, #tpu.memory_space<vmem>>, vector<64x128xf32>
    %cst_8 = arith.constant dense<0.000000e+00> : vector<1x64xf32>
    %6 = tpu.matmul %0, %1, %cst_8 {dimension_numbers = #tpu.dot_dimension_numbers<[1], [0], [0], [1], [0, 0, 1, 1], [], []>} : vector<1x8xf32>, vector<8x64xf32>, vector<1x64xf32> -> vector<1x64xf32>
    %cst_9 = arith.constant 1.250000e-01 : f32
    %7 = vector.broadcast %cst_9 : f32 to vector<1x64xf32>
    %8 = arith.mulf %6, %7 : vector<1x64xf32>
    %9 = arith.mulf %1, %1 : vector<8x64xf32>
    %cst_10 = arith.constant dense<0.000000e+00> : vector<1x64xf32>
    %10 = tpu.matmul %0, %9, %cst_10 {dimension_numbers = #tpu.dot_dimension_numbers<[1], [0], [0], [1], [0, 0, 1, 1], [], []>} : vector<1x8xf32>, vector<8x64xf32>, vector<1x64xf32> -> vector<1x64xf32>
    %cst_11 = arith.constant 1.250000e-01 : f32
    %11 = vector.broadcast %cst_11 : f32 to vector<1x64xf32>
    %12 = arith.mulf %10, %11 : vector<1x64xf32>
    %13 = arith.mulf %8, %8 : vector<1x64xf32>
    %14 = arith.subf %12, %13 : vector<1x64xf32>
    %cst_12 = arith.constant 0.000000e+00 : f32
    %15 = vector.broadcast %cst_12 : f32 to vector<1x64xf32>
    %16 = arith.maximumf %14, %15 : vector<1x64xf32>
    %cst_13 = arith.constant 9.99999974E-6 : f32
    %17 = vector.broadcast %cst_13 : f32 to vector<1x64xf32>
    %18 = arith.addf %16, %17 : vector<1x64xf32>
    %19 = math.rsqrt %18 : vector<1x64xf32>
    %20 = arith.mulf %19, %2 : vector<1x64xf32>
    %21 = arith.mulf %8, %20 : vector<1x64xf32>
    %22 = arith.subf %3, %21 : vector<1x64xf32>
    %23 = tpu.iota {dimensions = array<i32: 0>} : vector<64x64xi32>
    %24 = tpu.iota {dimensions = array<i32: 1>} : vector<64x64xi32>
    %25 = arith.cmpi eq, %23, %24 : vector<64x64xi32>
    %26 = vector.shape_cast %20 : vector<1x64xf32> to vector<1x64xf32>
    %27 = vector.broadcast %26 : vector<1x64xf32> to vector<64x64xf32>
    %cst_14 = arith.constant 0.000000e+00 : f32
    %28 = vector.broadcast %cst_14 : f32 to vector<64x64xf32>
    %29 = arith.select %25, %27, %28 : vector<64x64xi1>, vector<64x64xf32>
    %cst_15 = arith.constant dense<0.000000e+00> : vector<64xf32>
    %30 = vector.multi_reduction <add>, %29, %cst_15 [1] : vector<64x64xf32> to vector<64xf32>
    %31 = vector.shape_cast %30 : vector<64xf32> to vector<64x1xf32>
    %32 = vector.broadcast %31 : vector<64x1xf32> to vector<64x128xf32>
    %33 = arith.mulf %32, %5 : vector<64x128xf32>
    %cst_16 = arith.constant dense<0.000000e+00> : vector<1x128xf32>
    %34 = tpu.matmul %22, %5, %cst_16 {dimension_numbers = #tpu.dot_dimension_numbers<[1], [0], [0], [1], [0, 0, 1, 1], [], []>} : vector<1x64xf32>, vector<64x128xf32>, vector<1x128xf32> -> vector<1x128xf32>
    %35 = arith.addf %34, %4 : vector<1x128xf32>
    %cst_17 = arith.constant dense<0.000000e+00> : vector<8x128xf32>
    %36 = tpu.matmul %1, %33, %cst_17 {dimension_numbers = #tpu.dot_dimension_numbers<[1], [0], [0], [1], [0, 0, 1, 1], [], []>} : vector<8x64xf32>, vector<64x128xf32>, vector<8x128xf32> -> vector<8x128xf32>
    %37 = vector.broadcast %35 : vector<1x128xf32> to vector<8x128xf32>
    %38 = arith.addf %36, %37 : vector<8x128xf32>
    %39 = math.tanh %38 : vector<8x128xf32>
    %c1_18 = arith.constant 1 : index
    %c0_19 = arith.constant 0 : index
    %40 = vector.load %arg4[%c1_18, %c0_19] : memref<16x128xf32, #tpu.memory_space<vmem>>, vector<1x128xf32>
    %c2 = arith.constant 2 : index
    %c0_20 = arith.constant 0 : index
    %41 = vector.load %arg4[%c2, %c0_20] : memref<16x128xf32, #tpu.memory_space<vmem>>, vector<1x128xf32>
    %c3 = arith.constant 3 : index
    %c0_21 = arith.constant 0 : index
    %42 = vector.load %arg4[%c3, %c0_21] : memref<16x128xf32, #tpu.memory_space<vmem>>, vector<1x128xf32>
    %c0_22 = arith.constant 0 : index
    %c0_23 = arith.constant 0 : index
    %43 = vector.load %arg3[%c0_22, %c0_23] : memref<512x128xf32, #tpu.memory_space<vmem>>, vector<128x128xf32>
    %cst_24 = arith.constant dense<0.000000e+00> : vector<1x128xf32>
    %44 = tpu.matmul %0, %39, %cst_24 {dimension_numbers = #tpu.dot_dimension_numbers<[1], [0], [0], [1], [0, 0, 1, 1], [], []>} : vector<1x8xf32>, vector<8x128xf32>, vector<1x128xf32> -> vector<1x128xf32>
    %cst_25 = arith.constant 1.250000e-01 : f32
    %45 = vector.broadcast %cst_25 : f32 to vector<1x128xf32>
    %46 = arith.mulf %44, %45 : vector<1x128xf32>
    %47 = arith.mulf %39, %39 : vector<8x128xf32>
    %cst_26 = arith.constant dense<0.000000e+00> : vector<1x128xf32>
    %48 = tpu.matmul %0, %47, %cst_26 {dimension_numbers = #tpu.dot_dimension_numbers<[1], [0], [0], [1], [0, 0, 1, 1], [], []>} : vector<1x8xf32>, vector<8x128xf32>, vector<1x128xf32> -> vector<1x128xf32>
    %cst_27 = arith.constant 1.250000e-01 : f32
    %49 = vector.broadcast %cst_27 : f32 to vector<1x128xf32>
    %50 = arith.mulf %48, %49 : vector<1x128xf32>
    %51 = arith.mulf %46, %46 : vector<1x128xf32>
    %52 = arith.subf %50, %51 : vector<1x128xf32>
    %cst_28 = arith.constant 0.000000e+00 : f32
    %53 = vector.broadcast %cst_28 : f32 to vector<1x128xf32>
    %54 = arith.maximumf %52, %53 : vector<1x128xf32>
    %cst_29 = arith.constant 9.99999974E-6 : f32
    %55 = vector.broadcast %cst_29 : f32 to vector<1x128xf32>
    %56 = arith.addf %54, %55 : vector<1x128xf32>
    %57 = math.rsqrt %56 : vector<1x128xf32>
    %58 = arith.mulf %57, %40 : vector<1x128xf32>
    %59 = arith.mulf %46, %58 : vector<1x128xf32>
    %60 = arith.subf %41, %59 : vector<1x128xf32>
    %61 = tpu.iota {dimensions = array<i32: 0>} : vector<128x128xi32>
    %62 = tpu.iota {dimensions = array<i32: 1>} : vector<128x128xi32>
    %63 = arith.cmpi eq, %61, %62 : vector<128x128xi32>
    %64 = vector.shape_cast %58 : vector<1x128xf32> to vector<1x128xf32>
    %65 = vector.broadcast %64 : vector<1x128xf32> to vector<128x128xf32>
    %cst_30 = arith.constant 0.000000e+00 : f32
    %66 = vector.broadcast %cst_30 : f32 to vector<128x128xf32>
    %67 = arith.select %63, %65, %66 : vector<128x128xi1>, vector<128x128xf32>
    %cst_31 = arith.constant dense<0.000000e+00> : vector<128xf32>
    %68 = vector.multi_reduction <add>, %67, %cst_31 [1] : vector<128x128xf32> to vector<128xf32>
    %69 = vector.shape_cast %68 : vector<128xf32> to vector<128x1xf32>
    %70 = vector.broadcast %69 : vector<128x1xf32> to vector<128x128xf32>
    %71 = arith.mulf %70, %43 : vector<128x128xf32>
    %cst_32 = arith.constant dense<0.000000e+00> : vector<1x128xf32>
    %72 = tpu.matmul %60, %43, %cst_32 {dimension_numbers = #tpu.dot_dimension_numbers<[1], [0], [0], [1], [0, 0, 1, 1], [], []>} : vector<1x128xf32>, vector<128x128xf32>, vector<1x128xf32> -> vector<1x128xf32>
    %73 = arith.addf %72, %42 : vector<1x128xf32>
    %cst_33 = arith.constant dense<0.000000e+00> : vector<8x128xf32>
    %74 = tpu.matmul %39, %71, %cst_33 {dimension_numbers = #tpu.dot_dimension_numbers<[1], [0], [0], [1], [0, 0, 1, 1], [], []>} : vector<8x128xf32>, vector<128x128xf32>, vector<8x128xf32> -> vector<8x128xf32>
    %75 = vector.broadcast %73 : vector<1x128xf32> to vector<8x128xf32>
    %76 = arith.addf %74, %75 : vector<8x128xf32>
    %77 = math.tanh %76 : vector<8x128xf32>
    %c4 = arith.constant 4 : index
    %c0_34 = arith.constant 0 : index
    %78 = vector.load %arg4[%c4, %c0_34] : memref<16x128xf32, #tpu.memory_space<vmem>>, vector<1x128xf32>
    %c5 = arith.constant 5 : index
    %c0_35 = arith.constant 0 : index
    %79 = vector.load %arg4[%c5, %c0_35] : memref<16x128xf32, #tpu.memory_space<vmem>>, vector<1x128xf32>
    %c6 = arith.constant 6 : index
    %c0_36 = arith.constant 0 : index
    %80 = vector.load %arg4[%c6, %c0_36] : memref<16x128xf32, #tpu.memory_space<vmem>>, vector<1x128xf32>
    %c128 = arith.constant 128 : index
    %c0_37 = arith.constant 0 : index
    %81 = vector.load %arg3[%c128, %c0_37] : memref<512x128xf32, #tpu.memory_space<vmem>>, vector<128x128xf32>
    %cst_38 = arith.constant dense<0.000000e+00> : vector<1x128xf32>
    %82 = tpu.matmul %0, %77, %cst_38 {dimension_numbers = #tpu.dot_dimension_numbers<[1], [0], [0], [1], [0, 0, 1, 1], [], []>} : vector<1x8xf32>, vector<8x128xf32>, vector<1x128xf32> -> vector<1x128xf32>
    %cst_39 = arith.constant 1.250000e-01 : f32
    %83 = vector.broadcast %cst_39 : f32 to vector<1x128xf32>
    %84 = arith.mulf %82, %83 : vector<1x128xf32>
    %85 = arith.mulf %77, %77 : vector<8x128xf32>
    %cst_40 = arith.constant dense<0.000000e+00> : vector<1x128xf32>
    %86 = tpu.matmul %0, %85, %cst_40 {dimension_numbers = #tpu.dot_dimension_numbers<[1], [0], [0], [1], [0, 0, 1, 1], [], []>} : vector<1x8xf32>, vector<8x128xf32>, vector<1x128xf32> -> vector<1x128xf32>
    %cst_41 = arith.constant 1.250000e-01 : f32
    %87 = vector.broadcast %cst_41 : f32 to vector<1x128xf32>
    %88 = arith.mulf %86, %87 : vector<1x128xf32>
    %89 = arith.mulf %84, %84 : vector<1x128xf32>
    %90 = arith.subf %88, %89 : vector<1x128xf32>
    %cst_42 = arith.constant 0.000000e+00 : f32
    %91 = vector.broadcast %cst_42 : f32 to vector<1x128xf32>
    %92 = arith.maximumf %90, %91 : vector<1x128xf32>
    %cst_43 = arith.constant 9.99999974E-6 : f32
    %93 = vector.broadcast %cst_43 : f32 to vector<1x128xf32>
    %94 = arith.addf %92, %93 : vector<1x128xf32>
    %95 = math.rsqrt %94 : vector<1x128xf32>
    %96 = arith.mulf %95, %78 : vector<1x128xf32>
    %97 = arith.mulf %84, %96 : vector<1x128xf32>
    %98 = arith.subf %79, %97 : vector<1x128xf32>
    %99 = tpu.iota {dimensions = array<i32: 0>} : vector<128x128xi32>
    %100 = tpu.iota {dimensions = array<i32: 1>} : vector<128x128xi32>
    %101 = arith.cmpi eq, %99, %100 : vector<128x128xi32>
    %102 = vector.shape_cast %96 : vector<1x128xf32> to vector<1x128xf32>
    %103 = vector.broadcast %102 : vector<1x128xf32> to vector<128x128xf32>
    %cst_44 = arith.constant 0.000000e+00 : f32
    %104 = vector.broadcast %cst_44 : f32 to vector<128x128xf32>
    %105 = arith.select %101, %103, %104 : vector<128x128xi1>, vector<128x128xf32>
    %cst_45 = arith.constant dense<0.000000e+00> : vector<128xf32>
    %106 = vector.multi_reduction <add>, %105, %cst_45 [1] : vector<128x128xf32> to vector<128xf32>
    %107 = vector.shape_cast %106 : vector<128xf32> to vector<128x1xf32>
    %108 = vector.broadcast %107 : vector<128x1xf32> to vector<128x128xf32>
    %109 = arith.mulf %108, %81 : vector<128x128xf32>
    %cst_46 = arith.constant dense<0.000000e+00> : vector<1x128xf32>
    %110 = tpu.matmul %98, %81, %cst_46 {dimension_numbers = #tpu.dot_dimension_numbers<[1], [0], [0], [1], [0, 0, 1, 1], [], []>} : vector<1x128xf32>, vector<128x128xf32>, vector<1x128xf32> -> vector<1x128xf32>
    %111 = arith.addf %110, %80 : vector<1x128xf32>
    %cst_47 = arith.constant dense<0.000000e+00> : vector<8x128xf32>
    %112 = tpu.matmul %77, %109, %cst_47 {dimension_numbers = #tpu.dot_dimension_numbers<[1], [0], [0], [1], [0, 0, 1, 1], [], []>} : vector<8x128xf32>, vector<128x128xf32>, vector<8x128xf32> -> vector<8x128xf32>
    %113 = vector.broadcast %111 : vector<1x128xf32> to vector<8x128xf32>
    %114 = arith.addf %112, %113 : vector<8x128xf32>
    %115 = math.tanh %114 : vector<8x128xf32>
    %c7 = arith.constant 7 : index
    %c0_48 = arith.constant 0 : index
    %116 = vector.load %arg4[%c7, %c0_48] : memref<16x128xf32, #tpu.memory_space<vmem>>, vector<1x128xf32>
    %c8 = arith.constant 8 : index
    %c0_49 = arith.constant 0 : index
    %117 = vector.load %arg4[%c8, %c0_49] : memref<16x128xf32, #tpu.memory_space<vmem>>, vector<1x128xf32>
    %c9 = arith.constant 9 : index
    %c0_50 = arith.constant 0 : index
    %118 = vector.load %arg4[%c9, %c0_50] : memref<16x128xf32, #tpu.memory_space<vmem>>, vector<1x128xf32>
    %c256 = arith.constant 256 : index
    %c0_51 = arith.constant 0 : index
    %119 = vector.load %arg3[%c256, %c0_51] : memref<512x128xf32, #tpu.memory_space<vmem>>, vector<128x128xf32>
    %cst_52 = arith.constant dense<0.000000e+00> : vector<1x128xf32>
    %120 = tpu.matmul %0, %115, %cst_52 {dimension_numbers = #tpu.dot_dimension_numbers<[1], [0], [0], [1], [0, 0, 1, 1], [], []>} : vector<1x8xf32>, vector<8x128xf32>, vector<1x128xf32> -> vector<1x128xf32>
    %cst_53 = arith.constant 1.250000e-01 : f32
    %121 = vector.broadcast %cst_53 : f32 to vector<1x128xf32>
    %122 = arith.mulf %120, %121 : vector<1x128xf32>
    %123 = arith.mulf %115, %115 : vector<8x128xf32>
    %cst_54 = arith.constant dense<0.000000e+00> : vector<1x128xf32>
    %124 = tpu.matmul %0, %123, %cst_54 {dimension_numbers = #tpu.dot_dimension_numbers<[1], [0], [0], [1], [0, 0, 1, 1], [], []>} : vector<1x8xf32>, vector<8x128xf32>, vector<1x128xf32> -> vector<1x128xf32>
    %cst_55 = arith.constant 1.250000e-01 : f32
    %125 = vector.broadcast %cst_55 : f32 to vector<1x128xf32>
    %126 = arith.mulf %124, %125 : vector<1x128xf32>
    %127 = arith.mulf %122, %122 : vector<1x128xf32>
    %128 = arith.subf %126, %127 : vector<1x128xf32>
    %cst_56 = arith.constant 0.000000e+00 : f32
    %129 = vector.broadcast %cst_56 : f32 to vector<1x128xf32>
    %130 = arith.maximumf %128, %129 : vector<1x128xf32>
    %cst_57 = arith.constant 9.99999974E-6 : f32
    %131 = vector.broadcast %cst_57 : f32 to vector<1x128xf32>
    %132 = arith.addf %130, %131 : vector<1x128xf32>
    %133 = math.rsqrt %132 : vector<1x128xf32>
    %134 = arith.mulf %133, %116 : vector<1x128xf32>
    %135 = arith.mulf %122, %134 : vector<1x128xf32>
    %136 = arith.subf %117, %135 : vector<1x128xf32>
    %137 = tpu.iota {dimensions = array<i32: 0>} : vector<128x128xi32>
    %138 = tpu.iota {dimensions = array<i32: 1>} : vector<128x128xi32>
    %139 = arith.cmpi eq, %137, %138 : vector<128x128xi32>
    %140 = vector.shape_cast %134 : vector<1x128xf32> to vector<1x128xf32>
    %141 = vector.broadcast %140 : vector<1x128xf32> to vector<128x128xf32>
    %cst_58 = arith.constant 0.000000e+00 : f32
    %142 = vector.broadcast %cst_58 : f32 to vector<128x128xf32>
    %143 = arith.select %139, %141, %142 : vector<128x128xi1>, vector<128x128xf32>
    %cst_59 = arith.constant dense<0.000000e+00> : vector<128xf32>
    %144 = vector.multi_reduction <add>, %143, %cst_59 [1] : vector<128x128xf32> to vector<128xf32>
    %145 = vector.shape_cast %144 : vector<128xf32> to vector<128x1xf32>
    %146 = vector.broadcast %145 : vector<128x1xf32> to vector<128x128xf32>
    %147 = arith.mulf %146, %119 : vector<128x128xf32>
    %cst_60 = arith.constant dense<0.000000e+00> : vector<1x128xf32>
    %148 = tpu.matmul %136, %119, %cst_60 {dimension_numbers = #tpu.dot_dimension_numbers<[1], [0], [0], [1], [0, 0, 1, 1], [], []>} : vector<1x128xf32>, vector<128x128xf32>, vector<1x128xf32> -> vector<1x128xf32>
    %149 = arith.addf %148, %118 : vector<1x128xf32>
    %cst_61 = arith.constant dense<0.000000e+00> : vector<8x128xf32>
    %150 = tpu.matmul %115, %147, %cst_61 {dimension_numbers = #tpu.dot_dimension_numbers<[1], [0], [0], [1], [0, 0, 1, 1], [], []>} : vector<8x128xf32>, vector<128x128xf32>, vector<8x128xf32> -> vector<8x128xf32>
    %151 = vector.broadcast %149 : vector<1x128xf32> to vector<8x128xf32>
    %152 = arith.addf %150, %151 : vector<8x128xf32>
    %153 = math.tanh %152 : vector<8x128xf32>
    %c10 = arith.constant 10 : index
    %c0_62 = arith.constant 0 : index
    %154 = vector.load %arg4[%c10, %c0_62] : memref<16x128xf32, #tpu.memory_space<vmem>>, vector<1x128xf32>
    %c11 = arith.constant 11 : index
    %c0_63 = arith.constant 0 : index
    %155 = vector.load %arg4[%c11, %c0_63] : memref<16x128xf32, #tpu.memory_space<vmem>>, vector<1x128xf32>
    %c12 = arith.constant 12 : index
    %c0_64 = arith.constant 0 : index
    %156 = vector.load %arg4[%c12, %c0_64] : memref<16x128xf32, #tpu.memory_space<vmem>>, vector<1x128xf32>
    %c384 = arith.constant 384 : index
    %c0_65 = arith.constant 0 : index
    %157 = vector.load %arg3[%c384, %c0_65] : memref<512x128xf32, #tpu.memory_space<vmem>>, vector<128x128xf32>
    %cst_66 = arith.constant dense<0.000000e+00> : vector<1x128xf32>
    %158 = tpu.matmul %0, %153, %cst_66 {dimension_numbers = #tpu.dot_dimension_numbers<[1], [0], [0], [1], [0, 0, 1, 1], [], []>} : vector<1x8xf32>, vector<8x128xf32>, vector<1x128xf32> -> vector<1x128xf32>
    %cst_67 = arith.constant 1.250000e-01 : f32
    %159 = vector.broadcast %cst_67 : f32 to vector<1x128xf32>
    %160 = arith.mulf %158, %159 : vector<1x128xf32>
    %161 = arith.mulf %153, %153 : vector<8x128xf32>
    %cst_68 = arith.constant dense<0.000000e+00> : vector<1x128xf32>
    %162 = tpu.matmul %0, %161, %cst_68 {dimension_numbers = #tpu.dot_dimension_numbers<[1], [0], [0], [1], [0, 0, 1, 1], [], []>} : vector<1x8xf32>, vector<8x128xf32>, vector<1x128xf32> -> vector<1x128xf32>
    %cst_69 = arith.constant 1.250000e-01 : f32
    %163 = vector.broadcast %cst_69 : f32 to vector<1x128xf32>
    %164 = arith.mulf %162, %163 : vector<1x128xf32>
    %165 = arith.mulf %160, %160 : vector<1x128xf32>
    %166 = arith.subf %164, %165 : vector<1x128xf32>
    %cst_70 = arith.constant 0.000000e+00 : f32
    %167 = vector.broadcast %cst_70 : f32 to vector<1x128xf32>
    %168 = arith.maximumf %166, %167 : vector<1x128xf32>
    %cst_71 = arith.constant 9.99999974E-6 : f32
    %169 = vector.broadcast %cst_71 : f32 to vector<1x128xf32>
    %170 = arith.addf %168, %169 : vector<1x128xf32>
    %171 = math.rsqrt %170 : vector<1x128xf32>
    %172 = arith.mulf %171, %154 : vector<1x128xf32>
    %173 = arith.mulf %160, %172 : vector<1x128xf32>
    %174 = arith.subf %155, %173 : vector<1x128xf32>
    %175 = tpu.iota {dimensions = array<i32: 0>} : vector<128x128xi32>
    %176 = tpu.iota {dimensions = array<i32: 1>} : vector<128x128xi32>
    %177 = arith.cmpi eq, %175, %176 : vector<128x128xi32>
    %178 = vector.shape_cast %172 : vector<1x128xf32> to vector<1x128xf32>
    %179 = vector.broadcast %178 : vector<1x128xf32> to vector<128x128xf32>
    %cst_72 = arith.constant 0.000000e+00 : f32
    %180 = vector.broadcast %cst_72 : f32 to vector<128x128xf32>
    %181 = arith.select %177, %179, %180 : vector<128x128xi1>, vector<128x128xf32>
    %cst_73 = arith.constant dense<0.000000e+00> : vector<128xf32>
    %182 = vector.multi_reduction <add>, %181, %cst_73 [1] : vector<128x128xf32> to vector<128xf32>
    %183 = vector.shape_cast %182 : vector<128xf32> to vector<128x1xf32>
    %184 = vector.broadcast %183 : vector<128x1xf32> to vector<128x128xf32>
    %185 = arith.mulf %184, %157 : vector<128x128xf32>
    %cst_74 = arith.constant dense<0.000000e+00> : vector<1x128xf32>
    %186 = tpu.matmul %174, %157, %cst_74 {dimension_numbers = #tpu.dot_dimension_numbers<[1], [0], [0], [1], [0, 0, 1, 1], [], []>} : vector<1x128xf32>, vector<128x128xf32>, vector<1x128xf32> -> vector<1x128xf32>
    %187 = arith.addf %186, %156 : vector<1x128xf32>
    %cst_75 = arith.constant dense<0.000000e+00> : vector<8x128xf32>
    %188 = tpu.matmul %153, %185, %cst_75 {dimension_numbers = #tpu.dot_dimension_numbers<[1], [0], [0], [1], [0, 0, 1, 1], [], []>} : vector<8x128xf32>, vector<128x128xf32>, vector<8x128xf32> -> vector<8x128xf32>
    %189 = vector.broadcast %187 : vector<1x128xf32> to vector<8x128xf32>
    %190 = arith.addf %188, %189 : vector<8x128xf32>
    %c0_76 = arith.constant 0 : index
    %c0_77 = arith.constant 0 : index
    %191 = vector.load %arg5[%c0_76, %c0_77] : memref<8x128xf32, #tpu.memory_space<vmem>>, vector<8x128xf32>
    tpu.vector_store %arg5[%c0_76, %c0_77], %190 {strides = array<i32>} : memref<8x128xf32, #tpu.memory_space<vmem>>, vector<8x128xf32>,
    return
  }
}

</mosaic_0001>

<llo_original>
// kernel: nn_forward.1
$region0: #{nn_forward.1}
  #allocation0 [shape = 'u32[]', space=smem, size = 0x4, offset = 0x4, fixed_abs, tag = 'smem constant byte address 0x4 - core index']
  #allocation1 [shape = 'u32[144,128]{1,0:T(1,128)}', space=vmem, size = 0x12000, scoped, tag = 'internal scratch']
  %s0 = inlined_call_operand.vmem [shape: f32[8,64], index: 0, kind: input, shape index: {}]
  %s1 = inlined_call_operand.vmem [shape: f32[64,128], index: 1, kind: input, shape index: {}]
  %s2 = inlined_call_operand.vmem [shape: f32[8,64], index: 2, kind: input, shape index: {}]
  %s3 = inlined_call_operand.vmem [shape: f32[512,128], index: 3, kind: input, shape index: {}]
  %s4 = inlined_call_operand.vmem [shape: f32[16,128], index: 4, kind: input, shape index: {}]
  %s5 = inlined_call_operand.vmem [shape: f32[8,128], index: 5, kind: output, shape index: {}]
  %s6 = sld [smem:[#allocation0]]
  $region30: #{nn_forward.1} parent=0
    _
  %s8 = ssub.s32 1, %s6
  %s9 = scalar_select 0, %s8, %s6
  // Predicated region
  $region2: #{nn_forward.1} parent=0 // pred_check
    _
  $region3: #{nn_forward.1} parent=0 // pred_check_branch
    %11 = sbr.rel (0) target = $region5
  $region4: #{nn_forward.1} parent=0 // pred_region
    _
  $region5: #{nn_forward.1} parent=0 // pred_fallthru
    _
  // Predicated region
  $region6: #{nn_forward.1} parent=0 // pred_check
    _
  $region7: #{nn_forward.1} parent=0 // pred_check_branch
    %13 = sbr.rel (0) target = $region9
  $region8: #{nn_forward.1} parent=0 // pred_region
    _
  $region9: #{nn_forward.1} parent=0 // pred_fallthru
    _
  // Predicated region
  $region10: #{nn_forward.1} parent=0 // pred_check
    _
  $region11: #{nn_forward.1} parent=0 // pred_check_branch
    %15 = sbr.rel (0) target = $region13
  $region12: #{nn_forward.1} parent=0 // pred_region
    _
  $region13: #{nn_forward.1} parent=0 // pred_fallthru
    _
  // Predicated region
  $region14: #{nn_forward.1} parent=0 // pred_check
    _
  $region15: #{nn_forward.1} parent=0 // pred_check_branch
    %17 = sbr.rel (0) target = $region17
  $region16: #{nn_forward.1} parent=0 // pred_region
    _
  $region17: #{nn_forward.1} parent=0 // pred_fallthru
    _
  // Predicated region
  $region18: #{nn_forward.1} parent=0 // pred_check
    _
  $region19: #{nn_forward.1} parent=0 // pred_check_branch
    %19 = sbr.rel (0) target = $region21
  $region20: #{nn_forward.1} parent=0 // pred_region
    _
  $region21: #{nn_forward.1} parent=0 // pred_fallthru
    _
  %v20 = vld [vmem:[%s0] sm:$0xff]
  %v21 = vld [vmem:[%s2] sm:$0x1]
  %v22 = vld [vmem:[%s2 + $0x1] sm:$0x1]
  %v23 = vld [vmem:[%s4] sm:$0x1]
  %v24 = vld [vmem:[%s1] sm:$0xff]
  %v25 = vld [vmem:[%s1 + $0x8] sm:$0xff]
  %v26 = vld [vmem:[%s1 + $0x10] sm:$0xff]
  %v27 = vld [vmem:[%s1 + $0x18] sm:$0xff]
  %v28 = vld [vmem:[%s1 + $0x20] sm:$0xff]
  %v29 = vld [vmem:[%s1 + $0x28] sm:$0xff]
  %v30 = vld [vmem:[%s1 + $0x30] sm:$0xff]
  %v31 = vld [vmem:[%s1 + $0x38] sm:$0xff]
  %vm32 = vcmask 64512
  %v34 = vsel %vm32, 1.0, 0
  %36 = vmatprep.subr.mxu0 0.0
  %37 = vmatpush1.msra.mxu0 %v20
  %38 = vmatprep.subr.mxu0 0.0
  %39 = vmatpush1.msra.mxu0 0.0
  %40 = vmatprep.subr.mxu0 0.0
  %41 = vmatpush1.msra.mxu0 0.0
  %42 = vmatprep.subr.mxu0 0.0
  %43 = vmatpush1.msra.mxu0 0.0
  %44 = vmatprep.subr.mxu0 0.0
  %45 = vmatpush1.msra.mxu0 0.0
  %46 = vmatprep.subr.mxu0 0.0
  %47 = vmatpush1.msra.mxu0 0.0
  %48 = vmatprep.subr.mxu0 0.0
  %49 = vmatpush1.msra.mxu0 0.0
  %50 = vmatprep.subr.mxu0 0.0
  %51 = vmatpush1.msra.mxu0 0.0
  %52 = vmatprep.subr.mxu0 0.0
  %53 = vmatpush1.msra.mxu0 0.0
  %54 = vmatprep.subr.mxu0 0.0
  %55 = vmatpush1.msra.mxu0 0.0
  %56 = vmatprep.subr.mxu0 0.0
  %57 = vmatpush1.msra.mxu0 0.0
  %58 = vmatprep.subr.mxu0 0.0
  %59 = vmatpush1.msra.mxu0 0.0
  %60 = vmatprep.subr.mxu0 0.0
  %61 = vmatpush1.msra.mxu0 0.0
  %62 = vmatprep.subr.mxu0 0.0
  %63 = vmatpush1.msra.mxu0 0.0
  %64 = vmatprep.subr.mxu0 0.0
  %65 = vmatpush1.msra.mxu0 0.0
  %66 = vmatprep.subr.mxu0 0.0
  %67 = vmatpush1.msra.mxu0 0.0
  %68 = vmatprep.subr.mxu0 0.0
  %69 = vmatpush1.msra.mxu0 0.0
  %70 = vmatprep.subr.mxu0 0.0
  %71 = vmatpush1.msra.mxu0 0.0
  %72 = vmatprep.subr.mxu0 0.0
  %73 = vmatpush1.msra.mxu0 0.0
  %74 = vmatprep.subr.mxu0 0.0
  %75 = vmatpush1.msra.mxu0 0.0
  %76 = vmatprep.subr.mxu0 0.0
  %77 = vmatpush1.msra.mxu0 0.0
  %78 = vmatprep.subr.mxu0 0.0
  %79 = vmatpush1.msra.mxu0 0.0
  %80 = vmatprep.subr.mxu0 0.0
  %81 = vmatpush1.msra.mxu0 0.0
  %82 = vmatprep.subr.mxu0 0.0
  %83 = vmatpush1.msra.mxu0 0.0
  %84 = vmatprep.subr.mxu0 0.0
  %85 = vmatpush1.msra.mxu0 0.0
  %86 = vmatprep.subr.mxu0 0.0
  %87 = vmatpush1.msra.mxu0 0.0
  %88 = vmatprep.subr.mxu0 0.0
  %89 = vmatpush1.msra.mxu0 0.0
  %90 = vmatprep.subr.mxu0 0.0
  %91 = vmatpush1.msra.mxu0 0.0
  %92 = vmatprep.subr.mxu0 0.0
  %93 = vmatpush1.msra.mxu0 0.0
  %94 = vmatprep.subr.mxu0 0.0
  %95 = vmatpush1.msra.mxu0 0.0
  %96 = vmatprep.subr.mxu0 0.0
  %97 = vmatpush1.msra.mxu0 0.0
  %98 = vmatprep.subr.mxu0 0.0
  %99 = vmatpush1.msra.mxu0 0.0
  %100 = vmatprep.mubr.f32.mxu0 0.0
  %101 = vmatmul.mubr.f32.gmra.mrb[0].mxu0 %v34
  %v102 = vpop.f32.mrb[0].mxu0
  %v103 = vadd.f32 0.0, %v102
  %v104 = vpop.f32.mrb[0].mxu0
  %105 = vdwg.mxu0
  %v106 = vmul.f32 %v103, 0.125
  %v107 = vmul.f32 %v20, %v20
  %108 = vmatprep.subr.mxu0 0.0
  %109 = vmatpush1.msra.mxu0 %v107
  %110 = vmatprep.subr.mxu0 0.0
  %111 = vmatpush1.msra.mxu0 0.0
  %112 = vmatprep.subr.mxu0 0.0
  %113 = vmatpush1.msra.mxu0 0.0
  %114 = vmatprep.subr.mxu0 0.0
  %115 = vmatpush1.msra.mxu0 0.0
  %116 = vmatprep.subr.mxu0 0.0
  %117 = vmatpush1.msra.mxu0 0.0
  %118 = vmatprep.subr.mxu0 0.0
  %119 = vmatpush1.msra.mxu0 0.0
  %120 = vmatprep.subr.mxu0 0.0
  %121 = vmatpush1.msra.mxu0 0.0
  %122 = vmatprep.subr.mxu0 0.0
  %123 = vmatpush1.msra.mxu0 0.0
  %124 = vmatprep.subr.mxu0 0.0
  %125 = vmatpush1.msra.mxu0 0.0
  %126 = vmatprep.subr.mxu0 0.0
  %127 = vmatpush1.msra.mxu0 0.0
  %128 = vmatprep.subr.mxu0 0.0
  %129 = vmatpush1.msra.mxu0 0.0
  %130 = vmatprep.subr.mxu0 0.0
  %131 = vmatpush1.msra.mxu0 0.0
  %132 = vmatprep.subr.mxu0 0.0
  %133 = vmatpush1.msra.mxu0 0.0
  %134 = vmatprep.subr.mxu0 0.0
  %135 = vmatpush1.msra.mxu0 0.0
  %136 = vmatprep.subr.mxu0 0.0
  %137 = vmatpush1.msra.mxu0 0.0
  %138 = vmatprep.subr.mxu0 0.0
  %139 = vmatpush1.msra.mxu0 0.0
  %140 = vmatprep.subr.mxu0 0.0
  %141 = vmatpush1.msra.mxu0 0.0
  %142 = vmatprep.subr.mxu0 0.0
  %143 = vmatpush1.msra.mxu0 0.0
  %144 = vmatprep.subr.mxu0 0.0
  %145 = vmatpush1.msra.mxu0 0.0
  %146 = vmatprep.subr.mxu0 0.0
  %147 = vmatpush1.msra.mxu0 0.0
  %148 = vmatprep.subr.mxu0 0.0
  %149 = vmatpush1.msra.mxu0 0.0
  %150 = vmatprep.subr.mxu0 0.0
  %151 = vmatpush1.msra.mxu0 0.0
  %152 = vmatprep.subr.mxu0 0.0
  %153 = vmatpush1.msra.mxu0 0.0
  %154 = vmatprep.subr.mxu0 0.0
  %155 = vmatpush1.msra.mxu0 0.0
  %156 = vmatprep.subr.mxu0 0.0
  %157 = vmatpush1.msra.mxu0 0.0
  %158 = vmatprep.subr.mxu0 0.0
  %159 = vmatpush1.msra.mxu0 0.0
  %160 = vmatprep.subr.mxu0 0.0
  %161 = vmatpush1.msra.mxu0 0.0
  %162 = vmatprep.subr.mxu0 0.0
  %163 = vmatpush1.msra.mxu0 0.0
  %164 = vmatprep.subr.mxu0 0.0
  %165 = vmatpush1.msra.mxu0 0.0
  %166 = vmatprep.subr.mxu0 0.0
  %167 = vmatpush1.msra.mxu0 0.0
  %168 = vmatprep.subr.mxu0 0.0
  %169 = vmatpush1.msra.mxu0 0.0
  %170 = vmatprep.subr.mxu0 0.0
  %171 = vmatpush1.msra.mxu0 0.0
  %172 = vmatprep.mubr.f32.mxu0 0.0
  %173 = vmatmul.mubr.f32.gmra.mrb[0].mxu0 %v34
  %v174 = vpop.f32.mrb[0].mxu0
  %v175 = vadd.f32 0.0, %v174
  %v176 = vpop.f32.mrb[0].mxu0
  %177 = vdwg.mxu0
  %v178 = vmul.f32 %v175, 0.125
  %v179 = vmul.f32 %v106, %v106
  %v180 = vsub.f32 %v178, %v179
  %v181 = vmax.f32 %v180, 0.0
  %v182 = vadd.f32 %v181, 1e-05
  %v183 = vrsqrt.pop %v182
  %v184 = vmul.f32 %v183, %v21
  %v185 = vmul.f32 %v106, %v184
  %v186 = vsub.f32 %v22, %v185
  %v187 = vlaneseq
  %v188 = vshrl.u32 %v187, 7
  %v189 = vadd.s32 %v188, 8
  %v190 = vadd.s32 %v188, 16
  %v191 = vadd.s32 %v188, 24
  %v192 = vadd.s32 %v188, 32
  %v193 = vadd.s32 %v188, 40
  %v194 = vadd.s32 %v188, 48
  %v195 = vadd.s32 %v188, 56
  %v196 = vlaneseq
  %v197 = vand.u32 %v196, 127
  %vm198 = vcmp.eq.s32.totalorder %v188, %v197
  %vm199 = vcmp.eq.s32.totalorder %v189, %v197
  %vm200 = vcmp.eq.s32.totalorder %v190, %v197
  %vm201 = vcmp.eq.s32.totalorder %v191, %v197
  %vm202 = vcmp.eq.s32.totalorder %v192, %v197
  %vm203 = vcmp.eq.s32.totalorder %v193, %v197
  %vm204 = vcmp.eq.s32.totalorder %v194, %v197
  %vm205 = vcmp.eq.s32.totalorder %v195, %v197
  %v206 = vlaneseq
  %v207 = vshrl.u32 %v206, 7
  %v208 = vsub.s32 0, %v207
  %v209 = vrot.slane %v184, %v208
  %v210 = vsel %vm198, %v209, 0.0
  %v211 = vsel %vm199, %v209, 0.0
  %v212 = vsel %vm200, %v209, 0.0
  %v213 = vsel %vm201, %v209, 0.0
  %v214 = vsel %vm202, %v209, 0.0
  %v215 = vsel %vm203, %v209, 0.0
  %v216 = vsel %vm204, %v209, 0.0
  %v217 = vsel %vm205, %v209, 0.0
  %vm218 = vcmask 523264
  %v219 = vsel %vm218, %v210, 0.0
  %220 = vadd.xlane.f32.xlu0 %v219
  %v221 = vpop.xlane.xlu0 %220
  %v222 = vsel %vm218, %v211, 0.0
  %223 = vadd.xlane.f32.xlu0 %v222
  %v224 = vpop.xlane.xlu0 %223
  %v225 = vsel %vm218, %v212, 0.0
  %226 = vadd.xlane.f32.xlu0 %v225
  %v227 = vpop.xlane.xlu0 %226
  %v228 = vsel %vm218, %v213, 0.0
  %229 = vadd.xlane.f32.xlu0 %v228
  %v230 = vpop.xlane.xlu0 %229
  %v231 = vsel %vm218, %v214, 0.0
  %232 = vadd.xlane.f32.xlu0 %v231
  %v233 = vpop.xlane.xlu0 %232
  %v234 = vsel %vm218, %v215, 0.0
  %235 = vadd.xlane.f32.xlu0 %v234
  %v236 = vpop.xlane.xlu0 %235
  %v237 = vsel %vm218, %v216, 0.0
  %238 = vadd.xlane.f32.xlu0 %v237
  %v239 = vpop.xlane.xlu0 %238
  %v240 = vsel %vm218, %v217, 0.0
  %241 = vadd.xlane.f32.xlu0 %v240
  %v242 = vpop.xlane.xlu0 %241
  %v243 = vmul.f32 %v221, %v24
  %v244 = vmul.f32 %v224, %v25
  %v245 = vmul.f32 %v227, %v26
  %v246 = vmul.f32 %v230, %v27
  %v247 = vmul.f32 %v233, %v28
  %v248 = vmul.f32 %v236, %v29
  %v249 = vmul.f32 %v239, %v30
  %v250 = vmul.f32 %v242, %v31
  %v252 = vsel %vm218, %v186, 0
  %254 = vmatprep.subr.mxu0 0.0
  %255 = vmatpush1.msra.mxu0 %v24
  %256 = vmatprep.subr.mxu0 0.0
  %257 = vmatpush1.msra.mxu0 %v25
  %258 = vmatprep.subr.mxu0 0.0
  %259 = vmatpush1.msra.mxu0 %v26
  %260 = vmatprep.subr.mxu0 0.0
  %261 = vmatpush1.msra.mxu0 %v27
  %262 = vmatprep.subr.mxu0 0.0
  %263 = vmatpush1.msra.mxu0 %v28
  %264 = vmatprep.subr.mxu0 0.0
  %265 = vmatpush1.msra.mxu0 %v29
  %266 = vmatprep.subr.mxu0 0.0
  %267 = vmatpush1.msra.mxu0 %v30
  %268 = vmatprep.subr.mxu0 0.0
  %269 = vmatpush1.msra.mxu0 %v31
  %270 = vmatprep.subr.mxu0 0.0
  %271 = vmatpush1.msra.mxu0 0.0
  %272 = vmatprep.subr.mxu0 0.0
  %273 = vmatpush1.msra.mxu0 0.0
  %274 = vmatprep.subr.mxu0 0.0
  %275 = vmatpush1.msra.mxu0 0.0
  %276 = vmatprep.subr.mxu0 0.0
  %277 = vmatpush1.msra.mxu0 0.0
  %278 = vmatprep.subr.mxu0 0.0
  %279 = vmatpush1.msra.mxu0 0.0
  %280 = vmatprep.subr.mxu0 0.0
  %281 = vmatpush1.msra.mxu0 0.0
  %282 = vmatprep.subr.mxu0 0.0
  %283 = vmatpush1.msra.mxu0 0.0
  %284 = vmatprep.subr.mxu0 0.0
  %285 = vmatpush1.msra.mxu0 0.0
  %286 = vmatprep.subr.mxu0 0.0
  %287 = vmatpush1.msra.mxu0 0.0
  %288 = vmatprep.subr.mxu0 0.0
  %289 = vmatpush1.msra.mxu0 0.0
  %290 = vmatprep.subr.mxu0 0.0
  %291 = vmatpush1.msra.mxu0 0.0
  %292 = vmatprep.subr.mxu0 0.0
  %293 = vmatpush1.msra.mxu0 0.0
  %294 = vmatprep.subr.mxu0 0.0
  %295 = vmatpush1.msra.mxu0 0.0
  %296 = vmatprep.subr.mxu0 0.0
  %297 = vmatpush1.msra.mxu0 0.0
  %298 = vmatprep.subr.mxu0 0.0
  %299 = vmatpush1.msra.mxu0 0.0
  %300 = vmatprep.subr.mxu0 0.0
  %301 = vmatpush1.msra.mxu0 0.0
  %302 = vmatprep.subr.mxu0 0.0
  %303 = vmatpush1.msra.mxu0 0.0
  %304 = vmatprep.subr.mxu0 0.0
  %305 = vmatpush1.msra.mxu0 0.0
  %306 = vmatprep.subr.mxu0 0.0
  %307 = vmatpush1.msra.mxu0 0.0
  %308 = vmatprep.subr.mxu0 0.0
  %309 = vmatpush1.msra.mxu0 0.0
  %310 = vmatprep.subr.mxu0 0.0
  %311 = vmatpush1.msra.mxu0 0.0
  %312 = vmatprep.subr.mxu0 0.0
  %313 = vmatpush1.msra.mxu0 0.0
  %314 = vmatprep.subr.mxu0 0.0
  %315 = vmatpush1.msra.mxu0 0.0
  %316 = vmatprep.subr.mxu0 0.0
  %317 = vmatpush1.msra.mxu0 0.0
  %318 = vmatprep.mubr.f32.mxu0 0.0
  %319 = vmatmul.mubr.f32.gmra.mrb[0].mxu0 %v252
  %v320 = vpop.f32.mrb[0].mxu0
  %v321 = vadd.f32 %v23, %v320
  %v322 = vpop.f32.mrb[0].mxu0
  %323 = vdwg.mxu0
  %v324 = vlaneseq
  %v325 = vshrl.u32 %v324, 7
  %v326 = vsub.s32 0, %v325
  %v327 = vrot.slane %v321, %v326
  %v329 = vsel %vm218, %v20, 0
  %331 = vmatprep.subr.mxu0 0.0
  %332 = vmatpush1.msra.mxu0 %v243
  %333 = vmatprep.subr.mxu0 0.0
  %334 = vmatpush1.msra.mxu0 %v244
  %335 = vmatprep.subr.mxu0 0.0
  %336 = vmatpush1.msra.mxu0 %v245
  %337 = vmatprep.subr.mxu0 0.0
  %338 = vmatpush1.msra.mxu0 %v246
  %339 = vmatprep.subr.mxu0 0.0
  %340 = vmatpush1.msra.mxu0 %v247
  %341 = vmatprep.subr.mxu0 0.0
  %342 = vmatpush1.msra.mxu0 %v248
  %343 = vmatprep.subr.mxu0 0.0
  %344 = vmatpush1.msra.mxu0 %v249
  %345 = vmatprep.subr.mxu0 0.0
  %346 = vmatpush1.msra.mxu0 %v250
  %347 = vmatprep.subr.mxu0 0.0
  %348 = vmatpush1.msra.mxu0 0.0
  %349 = vmatprep.subr.mxu0 0.0
  %350 = vmatpush1.msra.mxu0 0.0
  %351 = vmatprep.subr.mxu0 0.0
  %352 = vmatpush1.msra.mxu0 0.0
  %353 = vmatprep.subr.mxu0 0.0
  %354 = vmatpush1.msra.mxu0 0.0
  %355 = vmatprep.subr.mxu0 0.0
  %356 = vmatpush1.msra.mxu0 0.0
  %357 = vmatprep.subr.mxu0 0.0
  %358 = vmatpush1.msra.mxu0 0.0
  %359 = vmatprep.subr.mxu0 0.0
  %360 = vmatpush1.msra.mxu0 0.0
  %361 = vmatprep.subr.mxu0 0.0
  %362 = vmatpush1.msra.mxu0 0.0
  %363 = vmatprep.subr.mxu0 0.0
  %364 = vmatpush1.msra.mxu0 0.0
  %365 = vmatprep.subr.mxu0 0.0
  %366 = vmatpush1.msra.mxu0 0.0
  %367 = vmatprep.subr.mxu0 0.0
  %368 = vmatpush1.msra.mxu0 0.0
  %369 = vmatprep.subr.mxu0 0.0
  %370 = vmatpush1.msra.mxu0 0.0
  %371 = vmatprep.subr.mxu0 0.0
  %372 = vmatpush1.msra.mxu0 0.0
  %373 = vmatprep.subr.mxu0 0.0
  %374 = vmatpush1.msra.mxu0 0.0
  %375 = vmatprep.subr.mxu0 0.0
  %376 = vmatpush1.msra.mxu0 0.0
  %377 = vmatprep.subr.mxu0 0.0
  %378 = vmatpush1.msra.mxu0 0.0
  %379 = vmatprep.subr.mxu0 0.0
  %380 = vmatpush1.msra.mxu0 0.0
  %381 = vmatprep.subr.mxu0 0.0
  %382 = vmatpush1.msra.mxu0 0.0
  %383 = vmatprep.subr.mxu0 0.0
  %384 = vmatpush1.msra.mxu0 0.0
  %385 = vmatprep.subr.mxu0 0.0
  %386 = vmatpush1.msra.mxu0 0.0
  %387 = vmatprep.subr.mxu0 0.0
  %388 = vmatpush1.msra.mxu0 0.0
  %389 = vmatprep.subr.mxu0 0.0
  %390 = vmatpush1.msra.mxu0 0.0
  %391 = vmatprep.subr.mxu0 0.0
  %392 = vmatpush1.msra.mxu0 0.0
  %393 = vmatprep.subr.mxu0 0.0
  %394 = vmatpush1.msra.mxu0 0.0
  %395 = vmatprep.mubr.f32.mxu0 0.0
  %396 = vmatmul.mubr.f32.gmra.mrb[0].mxu0 %v329
  %v397 = vpop.f32.mrb[0].mxu0
  %v398 = vadd.f32 %v327, %v397
  %v399 = vpop.f32.mrb[0].mxu0
  %400 = vdwg.mxu0
  %v401 = vtanh.pop %v398
  %v402 = vld [vmem:[%s4 + $0x1] sm:$0x1]
  %v403 = vld [vmem:[%s4 + $0x2] sm:$0x1]
  %v404 = vld [vmem:[%s4 + $0x3] sm:$0x1]
  %v405 = vld [vmem:[%s3] sm:$0xff]
  %v406 = vld [vmem:[%s3 + $0x8] sm:$0xff]
  %v407 = vld [vmem:[%s3 + $0x10] sm:$0xff]
  %v408 = vld [vmem:[%s3 + $0x18] sm:$0xff]
  %v409 = vld [vmem:[%s3 + $0x20] sm:$0xff]
  %v410 = vld [vmem:[%s3 + $0x28] sm:$0xff]
  %v411 = vld [vmem:[%s3 + $0x30] sm:$0xff]
  %v412 = vld [vmem:[%s3 + $0x38] sm:$0xff]
  %v413 = vld [vmem:[%s3 + $0x40] sm:$0xff]
  %v414 = vld [vmem:[%s3 + $0x48] sm:$0xff]
  %v415 = vld [vmem:[%s3 + $0x50] sm:$0xff]
  %v416 = vld [vmem:[%s3 + $0x58] sm:$0xff]
  %v417 = vld [vmem:[%s3 + $0x60] sm:$0xff]
  %v418 = vld [vmem:[%s3 + $0x68] sm:$0xff]
  %v419 = vld [vmem:[%s3 + $0x70] sm:$0xff]
  %v420 = vld [vmem:[%s3 + $0x78] sm:$0xff]
  %421 = vmatprep.subr.mxu0 0.0
  %422 = vmatpush1.msra.mxu0 %v401
  %423 = vmatprep.subr.mxu0 0.0
  %424 = vmatpush1.msra.mxu0 0.0
  %425 = vmatprep.subr.mxu0 0.0
  %426 = vmatpush1.msra.mxu0 0.0
  %427 = vmatprep.subr.mxu0 0.0
  %428 = vmatpush1.msra.mxu0 0.0
  %429 = vmatprep.subr.mxu0 0.0
  %430 = vmatpush1.msra.mxu0 0.0
  %431 = vmatprep.subr.mxu0 0.0
  %432 = vmatpush1.msra.mxu0 0.0
  %433 = vmatprep.subr.mxu0 0.0
  %434 = vmatpush1.msra.mxu0 0.0
  %435 = vmatprep.subr.mxu0 0.0
  %436 = vmatpush1.msra.mxu0 0.0
  %437 = vmatprep.subr.mxu0 0.0
  %438 = vmatpush1.msra.mxu0 0.0
  %439 = vmatprep.subr.mxu0 0.0
  %440 = vmatpush1.msra.mxu0 0.0
  %441 = vmatprep.subr.mxu0 0.0
  %442 = vmatpush1.msra.mxu0 0.0
  %443 = vmatprep.subr.mxu0 0.0
  %444 = vmatpush1.msra.mxu0 0.0
  %445 = vmatprep.subr.mxu0 0.0
  %446 = vmatpush1.msra.mxu0 0.0
  %447 = vmatprep.subr.mxu0 0.0
  %448 = vmatpush1.msra.mxu0 0.0
  %449 = vmatprep.subr.mxu0 0.0
  %450 = vmatpush1.msra.mxu0 0.0
  %451 = vmatprep.subr.mxu0 0.0
  %452 = vmatpush1.msra.mxu0 0.0
  %453 = vmatprep.subr.mxu0 0.0
  %454 = vmatpush1.msra.mxu0 0.0
  %455 = vmatprep.subr.mxu0 0.0
  %456 = vmatpush1.msra.mxu0 0.0
  %457 = vmatprep.subr.mxu0 0.0
  %458 = vmatpush1.msra.mxu0 0.0
  %459 = vmatprep.subr.mxu0 0.0
  %460 = vmatpush1.msra.mxu0 0.0
  %461 = vmatprep.subr.mxu0 0.0
  %462 = vmatpush1.msra.mxu0 0.0
  %463 = vmatprep.subr.mxu0 0.0
  %464 = vmatpush1.msra.mxu0 0.0
  %465 = vmatprep.subr.mxu0 0.0
  %466 = vmatpush1.msra.mxu0 0.0
  %467 = vmatprep.subr.mxu0 0.0
  %468 = vmatpush1.msra.mxu0 0.0
  %469 = vmatprep.subr.mxu0 0.0
  %470 = vmatpush1.msra.mxu0 0.0
  %471 = vmatprep.subr.mxu0 0.0
  %472 = vmatpush1.msra.mxu0 0.0
  %473 = vmatprep.subr.mxu0 0.0
  %474 = vmatpush1.msra.mxu0 0.0
  %475 = vmatprep.subr.mxu0 0.0
  %476 = vmatpush1.msra.mxu0 0.0
  %477 = vmatprep.subr.mxu0 0.0
  %478 = vmatpush1.msra.mxu0 0.0
  %479 = vmatprep.subr.mxu0 0.0
  %480 = vmatpush1.msra.mxu0 0.0
  %481 = vmatprep.subr.mxu0 0.0
  %482 = vmatpush1.msra.mxu0 0.0
  %483 = vmatprep.subr.mxu0 0.0
  %484 = vmatpush1.msra.mxu0 0.0
  %485 = vmatprep.mubr.f32.mxu0 0.0
  %486 = vmatmul.mubr.f32.gmra.mrb[0].mxu0 %v34
  %v487 = vpop.f32.mrb[0].mxu0
  %v488 = vadd.f32 0.0, %v487
  %v489 = vpop.f32.mrb[0].mxu0
  %490 = vdwg.mxu0
  %v491 = vmul.f32 %v488, 0.125
  %v492 = vmul.f32 %v401, %v401
  %493 = vmatprep.subr.mxu0 0.0
  %494 = vmatpush1.msra.mxu0 %v492
  %495 = vmatprep.subr.mxu0 0.0
  %496 = vmatpush1.msra.mxu0 0.0
  %497 = vmatprep.subr.mxu0 0.0
  %498 = vmatpush1.msra.mxu0 0.0
  %499 = vmatprep.subr.mxu0 0.0
  %500 = vmatpush1.msra.mxu0 0.0
  %501 = vmatprep.subr.mxu0 0.0
  %502 = vmatpush1.msra.mxu0 0.0
  %503 = vmatprep.subr.mxu0 0.0
  %504 = vmatpush1.msra.mxu0 0.0
  %505 = vmatprep.subr.mxu0 0.0
  %506 = vmatpush1.msra.mxu0 0.0
  %507 = vmatprep.subr.mxu0 0.0
  %508 = vmatpush1.msra.mxu0 0.0
  %509 = vmatprep.subr.mxu0 0.0
  %510 = vmatpush1.msra.mxu0 0.0
  %511 = vmatprep.subr.mxu0 0.0
  %512 = vmatpush1.msra.mxu0 0.0
  %513 = vmatprep.subr.mxu0 0.0
  %514 = vmatpush1.msra.mxu0 0.0
  %515 = vmatprep.subr.mxu0 0.0
  %516 = vmatpush1.msra.mxu0 0.0
  %517 = vmatprep.subr.mxu0 0.0
  %518 = vmatpush1.msra.mxu0 0.0
  %519 = vmatprep.subr.mxu0 0.0
  %520 = vmatpush1.msra.mxu0 0.0
  %521 = vmatprep.subr.mxu0 0.0
  %522 = vmatpush1.msra.mxu0 0.0
  %523 = vmatprep.subr.mxu0 0.0
  %524 = vmatpush1.msra.mxu0 0.0
  %525 = vmatprep.subr.mxu0 0.0
  %526 = vmatpush1.msra.mxu0 0.0
  %527 = vmatprep.subr.mxu0 0.0
  %528 = vmatpush1.msra.mxu0 0.0
  %529 = vmatprep.subr.mxu0 0.0
  %530 = vmatpush1.msra.mxu0 0.0
  %531 = vmatprep.subr.mxu0 0.0
  %532 = vmatpush1.msra.mxu0 0.0
  %533 = vmatprep.subr.mxu0 0.0
  %534 = vmatpush1.msra.mxu0 0.0
  %535 = vmatprep.subr.mxu0 0.0
  %536 = vmatpush1.msra.mxu0 0.0
  %537 = vmatprep.subr.mxu0 0.0
  %538 = vmatpush1.msra.mxu0 0.0
  %539 = vmatprep.subr.mxu0 0.0
  %540 = vmatpush1.msra.mxu0 0.0
  %541 = vmatprep.subr.mxu0 0.0
  %542 = vmatpush1.msra.mxu0 0.0
  %543 = vmatprep.subr.mxu0 0.0
  %544 = vmatpush1.msra.mxu0 0.0
  %545 = vmatprep.subr.mxu0 0.0
  %546 = vmatpush1.msra.mxu0 0.0
  %547 = vmatprep.subr.mxu0 0.0
  %548 = vmatpush1.msra.mxu0 0.0
  %549 = vmatprep.subr.mxu0 0.0
  %550 = vmatpush1.msra.mxu0 0.0
  %551 = vmatprep.subr.mxu0 0.0
  %552 = vmatpush1.msra.mxu0 0.0
  %553 = vmatprep.subr.mxu0 0.0
  %554 = vmatpush1.msra.mxu0 0.0
  %555 = vmatprep.subr.mxu0 0.0
  %556 = vmatpush1.msra.mxu0 0.0
  %557 = vmatprep.mubr.f32.mxu0 0.0
  %558 = vmatmul.mubr.f32.gmra.mrb[0].mxu0 %v34
  %v559 = vpop.f32.mrb[0].mxu0
  %v560 = vadd.f32 0.0, %v559
  %v561 = vpop.f32.mrb[0].mxu0
  %562 = vdwg.mxu0
  %v563 = vmul.f32 %v560, 0.125
  %v564 = vmul.f32 %v491, %v491
  %v565 = vsub.f32 %v563, %v564
  %v566 = vmax.f32 %v565, 0.0
  %v567 = vadd.f32 %v566, 1e-05
  %v568 = vrsqrt.pop %v567
  %v569 = vmul.f32 %v568, %v402
  %v570 = vmul.f32 %v491, %v569
  %v571 = vsub.f32 %v403, %v570
  %v572 = vadd.s32 %v188, 64
  %v573 = vadd.s32 %v188, 72
  %v574 = vadd.s32 %v188, 80
  %v575 = vadd.s32 %v188, 88
  %v576 = vadd.s32 %v188, 96
  %v577 = vadd.s32 %v188, 104
  %v578 = vadd.s32 %v188, 112
  %v579 = vadd.s32 %v188, 120
  %vm580 = vcmp.eq.s32.totalorder %v572, %v197
  %vm581 = vcmp.eq.s32.totalorder %v573, %v197
  %vm582 = vcmp.eq.s32.totalorder %v574, %v197
  %vm583 = vcmp.eq.s32.totalorder %v575, %v197
  %vm584 = vcmp.eq.s32.totalorder %v576, %v197
  %vm585 = vcmp.eq.s32.totalorder %v577, %v197
  %vm586 = vcmp.eq.s32.totalorder %v578, %v197
  %vm587 = vcmp.eq.s32.totalorder %v579, %v197
  %v588 = vlaneseq
  %v589 = vshrl.u32 %v588, 7
  %v590 = vsub.s32 0, %v589
  %v591 = vrot.slane %v569, %v590
  %v592 = vsel %vm198, %v591, 0.0
  %v593 = vsel %vm199, %v591, 0.0
  %v594 = vsel %vm200, %v591, 0.0
  %v595 = vsel %vm201, %v591, 0.0
  %v596 = vsel %vm202, %v591, 0.0
  %v597 = vsel %vm203, %v591, 0.0
  %v598 = vsel %vm204, %v591, 0.0
  %v599 = vsel %vm205, %v591, 0.0
  %v600 = vsel %vm580, %v591, 0.0
  %v601 = vsel %vm581, %v591, 0.0
  %v602 = vsel %vm582, %v591, 0.0
  %v603 = vsel %vm583, %v591, 0.0
  %v604 = vsel %vm584, %v591, 0.0
  %v605 = vsel %vm585, %v591, 0.0
  %v606 = vsel %vm586, %v591, 0.0
  %v607 = vsel %vm587, %v591, 0.0
  %608 = vadd.xlane.f32.xlu0 %v592
  %v609 = vpop.xlane.xlu0 %608
  %610 = vadd.xlane.f32.xlu0 %v593
  %v611 = vpop.xlane.xlu0 %610
  %612 = vadd.xlane.f32.xlu0 %v594
  %v613 = vpop.xlane.xlu0 %612
  %614 = vadd.xlane.f32.xlu0 %v595
  %v615 = vpop.xlane.xlu0 %614
  %616 = vadd.xlane.f32.xlu0 %v596
  %v617 = vpop.xlane.xlu0 %616
  %618 = vadd.xlane.f32.xlu0 %v597
  %v619 = vpop.xlane.xlu0 %618
  %620 = vadd.xlane.f32.xlu0 %v598
  %v621 = vpop.xlane.xlu0 %620
  %622 = vadd.xlane.f32.xlu0 %v599
  %v623 = vpop.xlane.xlu0 %622
  %624 = vadd.xlane.f32.xlu0 %v600
  %v625 = vpop.xlane.xlu0 %624
  %626 = vadd.xlane.f32.xlu0 %v601
  %v627 = vpop.xlane.xlu0 %626
  %628 = vadd.xlane.f32.xlu0 %v602
  %v629 = vpop.xlane.xlu0 %628
  %630 = vadd.xlane.f32.xlu0 %v603
  %v631 = vpop.xlane.xlu0 %630
  %632 = vadd.xlane.f32.xlu0 %v604
  %v633 = vpop.xlane.xlu0 %632
  %634 = vadd.xlane.f32.xlu0 %v605
  %v635 = vpop.xlane.xlu0 %634
  %636 = vadd.xlane.f32.xlu0 %v606
  %v637 = vpop.xlane.xlu0 %636
  %638 = vadd.xlane.f32.xlu0 %v607
  %v639 = vpop.xlane.xlu0 %638
  %v640 = vmul.f32 %v609, %v405
  %v641 = vmul.f32 %v611, %v406
  %v642 = vmul.f32 %v613, %v407
  %v643 = vmul.f32 %v615, %v408
  %v644 = vmul.f32 %v617, %v409
  %v645 = vmul.f32 %v619, %v410
  %v646 = vmul.f32 %v621, %v411
  %v647 = vmul.f32 %v623, %v412
  %v648 = vmul.f32 %v625, %v413
  %v649 = vmul.f32 %v627, %v414
  %v650 = vmul.f32 %v629, %v415
  %v651 = vmul.f32 %v631, %v416
  %v652 = vmul.f32 %v633, %v417
  %v653 = vmul.f32 %v635, %v418
  %v654 = vmul.f32 %v637, %v419
  %v655 = vmul.f32 %v639, %v420
  %656 = vmatprep.subr.mxu0 0.0
  %657 = vmatpush1.msra.mxu0 %v405
  %658 = vmatprep.subr.mxu0 0.0
  %659 = vmatpush1.msra.mxu0 %v406
  %660 = vmatprep.subr.mxu0 0.0
  %661 = vmatpush1.msra.mxu0 %v407
  %662 = vmatprep.subr.mxu0 0.0
  %663 = vmatpush1.msra.mxu0 %v408
  %664 = vmatprep.subr.mxu0 0.0
  %665 = vmatpush1.msra.mxu0 %v409
  %666 = vmatprep.subr.mxu0 0.0
  %667 = vmatpush1.msra.mxu0 %v410
  %668 = vmatprep.subr.mxu0 0.0
  %669 = vmatpush1.msra.mxu0 %v411
  %670 = vmatprep.subr.mxu0 0.0
  %671 = vmatpush1.msra.mxu0 %v412
  %672 = vmatprep.subr.mxu0 0.0
  %673 = vmatpush1.msra.mxu0 %v413
  %674 = vmatprep.subr.mxu0 0.0
  %675 = vmatpush1.msra.mxu0 %v414
  %676 = vmatprep.subr.mxu0 0.0
  %677 = vmatpush1.msra.mxu0 %v415
  %678 = vmatprep.subr.mxu0 0.0
  %679 = vmatpush1.msra.mxu0 %v416
  %680 = vmatprep.subr.mxu0 0.0
  %681 = vmatpush1.msra.mxu0 %v417
  %682 = vmatprep.subr.mxu0 0.0
  %683 = vmatpush1.msra.mxu0 %v418
  %684 = vmatprep.subr.mxu0 0.0
  %685 = vmatpush1.msra.mxu0 %v419
  %686 = vmatprep.subr.mxu0 0.0
  %687 = vmatpush1.msra.mxu0 %v420
  %688 = vmatprep.subr.mxu0 0.0
  %689 = vmatpush1.msra.mxu0 0.0
  %690 = vmatprep.subr.mxu0 0.0
  %691 = vmatpush1.msra.mxu0 0.0
  %692 = vmatprep.subr.mxu0 0.0
  %693 = vmatpush1.msra.mxu0 0.0
  %694 = vmatprep.subr.mxu0 0.0
  %695 = vmatpush1.msra.mxu0 0.0
  %696 = vmatprep.subr.mxu0 0.0
  %697 = vmatpush1.msra.mxu0 0.0
  %698 = vmatprep.subr.mxu0 0.0
  %699 = vmatpush1.msra.mxu0 0.0
  %700 = vmatprep.subr.mxu0 0.0
  %701 = vmatpush1.msra.mxu0 0.0
  %702 = vmatprep.subr.mxu0 0.0
  %703 = vmatpush1.msra.mxu0 0.0
  %704 = vmatprep.subr.mxu0 0.0
  %705 = vmatpush1.msra.mxu0 0.0
  %706 = vmatprep.subr.mxu0 0.0
  %707 = vmatpush1.msra.mxu0 0.0
  %708 = vmatprep.subr.mxu0 0.0
  %709 = vmatpush1.msra.mxu0 0.0
  %710 = vmatprep.subr.mxu0 0.0
  %711 = vmatpush1.msra.mxu0 0.0
  %712 = vmatprep.subr.mxu0 0.0
  %713 = vmatpush1.msra.mxu0 0.0
  %714 = vmatprep.subr.mxu0 0.0
  %715 = vmatpush1.msra.mxu0 0.0
  %716 = vmatprep.subr.mxu0 0.0
  %717 = vmatpush1.msra.mxu0 0.0
  %718 = vmatprep.subr.mxu0 0.0
  %719 = vmatpush1.msra.mxu0 0.0
  %720 = vmatprep.mubr.f32.mxu0 0.0
  %721 = vmatmul.mubr.f32.gmra.mrb[0].mxu0 %v571
  %v722 = vpop.f32.mrb[0].mxu0
  %v723 = vadd.f32 %v404, %v722
  %v724 = vpop.f32.mrb[0].mxu0
  %725 = vdwg.mxu0
  %v726 = vlaneseq
  %v727 = vshrl.u32 %v726, 7
  %v728 = vsub.s32 0, %v727
  %v729 = vrot.slane %v723, %v728
  %730 = vmatprep.subr.mxu0 0.0
  %731 = vmatpush1.msra.mxu0 %v640
  %732 = vmatprep.subr.mxu0 0.0
  %733 = vmatpush1.msra.mxu0 %v641
  %734 = vmatprep.subr.mxu0 0.0
  %735 = vmatpush1.msra.mxu0 %v642
  %736 = vmatprep.subr.mxu0 0.0
  %737 = vmatpush1.msra.mxu0 %v643
  %738 = vmatprep.subr.mxu0 0.0
  %739 = vmatpush1.msra.mxu0 %v644
  %740 = vmatprep.subr.mxu0 0.0
  %741 = vmatpush1.msra.mxu0 %v645
  %742 = vmatprep.subr.mxu0 0.0
  %743 = vmatpush1.msra.mxu0 %v646
  %744 = vmatprep.subr.mxu0 0.0
  %745 = vmatpush1.msra.mxu0 %v647
  %746 = vmatprep.subr.mxu0 0.0
  %747 = vmatpush1.msra.mxu0 %v648
  %748 = vmatprep.subr.mxu0 0.0
  %749 = vmatpush1.msra.mxu0 %v649
  %750 = vmatprep.subr.mxu0 0.0
  %751 = vmatpush1.msra.mxu0 %v650
  %752 = vmatprep.subr.mxu0 0.0
  %753 = vmatpush1.msra.mxu0 %v651
  %754 = vmatprep.subr.mxu0 0.0
  %755 = vmatpush1.msra.mxu0 %v652
  %756 = vmatprep.subr.mxu0 0.0
  %757 = vmatpush1.msra.mxu0 %v653
  %758 = vmatprep.subr.mxu0 0.0
  %759 = vmatpush1.msra.mxu0 %v654
  %760 = vmatprep.subr.mxu0 0.0
  %761 = vmatpush1.msra.mxu0 %v655
  %762 = vmatprep.subr.mxu0 0.0
  %763 = vmatpush1.msra.mxu0 0.0
  %764 = vmatprep.subr.mxu0 0.0
  %765 = vmatpush1.msra.mxu0 0.0
  %766 = vmatprep.subr.mxu0 0.0
  %767 = vmatpush1.msra.mxu0 0.0
  %768 = vmatprep.subr.mxu0 0.0
  %769 = vmatpush1.msra.mxu0 0.0
  %770 = vmatprep.subr.mxu0 0.0
  %771 = vmatpush1.msra.mxu0 0.0
  %772 = vmatprep.subr.mxu0 0.0
  %773 = vmatpush1.msra.mxu0 0.0
  %774 = vmatprep.subr.mxu0 0.0
  %775 = vmatpush1.msra.mxu0 0.0
  %776 = vmatprep.subr.mxu0 0.0
  %777 = vmatpush1.msra.mxu0 0.0
  %778 = vmatprep.subr.mxu0 0.0
  %779 = vmatpush1.msra.mxu0 0.0
  %780 = vmatprep.subr.mxu0 0.0
  %781 = vmatpush1.msra.mxu0 0.0
  %782 = vmatprep.subr.mxu0 0.0
  %783 = vmatpush1.msra.mxu0 0.0
  %784 = vmatprep.subr.mxu0 0.0
  %785 = vmatpush1.msra.mxu0 0.0
  %786 = vmatprep.subr.mxu0 0.0
  %787 = vmatpush1.msra.mxu0 0.0
  %788 = vmatprep.subr.mxu0 0.0
  %789 = vmatpush1.msra.mxu0 0.0
  %790 = vmatprep.subr.mxu0 0.0
  %791 = vmatpush1.msra.mxu0 0.0
  %792 = vmatprep.subr.mxu0 0.0
  %793 = vmatpush1.msra.mxu0 0.0
  %794 = vmatprep.mubr.f32.mxu0 0.0
  %795 = vmatmul.mubr.f32.gmra.mrb[0].mxu0 %v401
  %v796 = vpop.f32.mrb[0].mxu0
  %v797 = vadd.f32 %v729, %v796
  %v798 = vpop.f32.mrb[0].mxu0
  %799 = vdwg.mxu0
  %v800 = vtanh.pop %v797
  %v801 = vld [vmem:[%s4 + $0x4] sm:$0x1]
  %v802 = vld [vmem:[%s4 + $0x5] sm:$0x1]
  %v803 = vld [vmem:[%s4 + $0x6] sm:$0x1]
  %v804 = vld [vmem:[%s3 + $0x80] sm:$0xff]
  %v805 = vld [vmem:[%s3 + $0x88] sm:$0xff]
  %v806 = vld [vmem:[%s3 + $0x90] sm:$0xff]
  %v807 = vld [vmem:[%s3 + $0x98] sm:$0xff]
  %v808 = vld [vmem:[%s3 + $0xa0] sm:$0xff]
  %v809 = vld [vmem:[%s3 + $0xa8] sm:$0xff]
  %v810 = vld [vmem:[%s3 + $0xb0] sm:$0xff]
  %v811 = vld [vmem:[%s3 + $0xb8] sm:$0xff]
  %v812 = vld [vmem:[%s3 + $0xc0] sm:$0xff]
  %v813 = vld [vmem:[%s3 + $0xc8] sm:$0xff]
  %v814 = vld [vmem:[%s3 + $0xd0] sm:$0xff]
  %v815 = vld [vmem:[%s3 + $0xd8] sm:$0xff]
  %v816 = vld [vmem:[%s3 + $0xe0] sm:$0xff]
  %v817 = vld [vmem:[%s3 + $0xe8] sm:$0xff]
  %v818 = vld [vmem:[%s3 + $0xf0] sm:$0xff]
  %v819 = vld [vmem:[%s3 + $0xf8] sm:$0xff]
  %820 = vmatprep.subr.mxu0 0.0
  %821 = vmatpush1.msra.mxu0 %v800
  %822 = vmatprep.subr.mxu0 0.0
  %823 = vmatpush1.msra.mxu0 0.0
  %824 = vmatprep.subr.mxu0 0.0
  %825 = vmatpush1.msra.mxu0 0.0
  %826 = vmatprep.subr.mxu0 0.0
  %827 = vmatpush1.msra.mxu0 0.0
  %828 = vmatprep.subr.mxu0 0.0
  %829 = vmatpush1.msra.mxu0 0.0
  %830 = vmatprep.subr.mxu0 0.0
  %831 = vmatpush1.msra.mxu0 0.0
  %832 = vmatprep.subr.mxu0 0.0
  %833 = vmatpush1.msra.mxu0 0.0
  %834 = vmatprep.subr.mxu0 0.0
  %835 = vmatpush1.msra.mxu0 0.0
  %836 = vmatprep.subr.mxu0 0.0
  %837 = vmatpush1.msra.mxu0 0.0
  %838 = vmatprep.subr.mxu0 0.0
  %839 = vmatpush1.msra.mxu0 0.0
  %840 = vmatprep.subr.mxu0 0.0
  %841 = vmatpush1.msra.mxu0 0.0
  %842 = vmatprep.subr.mxu0 0.0
  %843 = vmatpush1.msra.mxu0 0.0
  %844 = vmatprep.subr.mxu0 0.0
  %845 = vmatpush1.msra.mxu0 0.0
  %846 = vmatprep.subr.mxu0 0.0
  %847 = vmatpush1.msra.mxu0 0.0
  %848 = vmatprep.subr.mxu0 0.0
  %849 = vmatpush1.msra.mxu0 0.0
  %850 = vmatprep.subr.mxu0 0.0
  %851 = vmatpush1.msra.mxu0 0.0
  %852 = vmatprep.subr.mxu0 0.0
  %853 = vmatpush1.msra.mxu0 0.0
  %854 = vmatprep.subr.mxu0 0.0
  %855 = vmatpush1.msra.mxu0 0.0
  %856 = vmatprep.subr.mxu0 0.0
  %857 = vmatpush1.msra.mxu0 0.0
  %858 = vmatprep.subr.mxu0 0.0
  %859 = vmatpush1.msra.mxu0 0.0
  %860 = vmatprep.subr.mxu0 0.0
  %861 = vmatpush1.msra.mxu0 0.0
  %862 = vmatprep.subr.mxu0 0.0
  %863 = vmatpush1.msra.mxu0 0.0
  %864 = vmatprep.subr.mxu0 0.0
  %865 = vmatpush1.msra.mxu0 0.0
  %866 = vmatprep.subr.mxu0 0.0
  %867 = vmatpush1.msra.mxu0 0.0
  %868 = vmatprep.subr.mxu0 0.0
  %869 = vmatpush1.msra.mxu0 0.0
  %870 = vmatprep.subr.mxu0 0.0
  %871 = vmatpush1.msra.mxu0 0.0
  %872 = vmatprep.subr.mxu0 0.0
  %873 = vmatpush1.msra.mxu0 0.0
  %874 = vmatprep.subr.mxu0 0.0
  %875 = vmatpush1.msra.mxu0 0.0
  %876 = vmatprep.subr.mxu0 0.0
  %877 = vmatpush1.msra.mxu0 0.0
  %878 = vmatprep.subr.mxu0 0.0
  %879 = vmatpush1.msra.mxu0 0.0
  %880 = vmatprep.subr.mxu0 0.0
  %881 = vmatpush1.msra.mxu0 0.0
  %882 = vmatprep.subr.mxu0 0.0
  %883 = vmatpush1.msra.mxu0 0.0
  %884 = vmatprep.mubr.f32.mxu0 0.0
  %885 = vmatmul.mubr.f32.gmra.mrb[0].mxu0 %v34
  %v886 = vpop.f32.mrb[0].mxu0
  %v887 = vadd.f32 0.0, %v886
  %v888 = vpop.f32.mrb[0].mxu0
  %889 = vdwg.mxu0
  %v890 = vmul.f32 %v887, 0.125
  %v891 = vmul.f32 %v800, %v800
  %892 = vmatprep.subr.mxu0 0.0
  %893 = vmatpush1.msra.mxu0 %v891
  %894 = vmatprep.subr.mxu0 0.0
  %895 = vmatpush1.msra.mxu0 0.0
  %896 = vmatprep.subr.mxu0 0.0
  %897 = vmatpush1.msra.mxu0 0.0
  %898 = vmatprep.subr.mxu0 0.0
  %899 = vmatpush1.msra.mxu0 0.0
  %900 = vmatprep.subr.mxu0 0.0
  %901 = vmatpush1.msra.mxu0 0.0
  %902 = vmatprep.subr.mxu0 0.0
  %903 = vmatpush1.msra.mxu0 0.0
  %904 = vmatprep.subr.mxu0 0.0
  %905 = vmatpush1.msra.mxu0 0.0
  %906 = vmatprep.subr.mxu0 0.0
  %907 = vmatpush1.msra.mxu0 0.0
  %908 = vmatprep.subr.mxu0 0.0
  %909 = vmatpush1.msra.mxu0 0.0
  %910 = vmatprep.subr.mxu0 0.0
  %911 = vmatpush1.msra.mxu0 0.0
  %912 = vmatprep.subr.mxu0 0.0
  %913 = vmatpush1.msra.mxu0 0.0
  %914 = vmatprep.subr.mxu0 0.0
  %915 = vmatpush1.msra.mxu0 0.0
  %916 = vmatprep.subr.mxu0 0.0
  %917 = vmatpush1.msra.mxu0 0.0
  %918 = vmatprep.subr.mxu0 0.0
  %919 = vmatpush1.msra.mxu0 0.0
  %920 = vmatprep.subr.mxu0 0.0
  %921 = vmatpush1.msra.mxu0 0.0
  %922 = vmatprep.subr.mxu0 0.0
  %923 = vmatpush1.msra.mxu0 0.0
  %924 = vmatprep.subr.mxu0 0.0
  %925 = vmatpush1.msra.mxu0 0.0
  %926 = vmatprep.subr.mxu0 0.0
  %927 = vmatpush1.msra.mxu0 0.0
  %928 = vmatprep.subr.mxu0 0.0
  %929 = vmatpush1.msra.mxu0 0.0
  %930 = vmatprep.subr.mxu0 0.0
  %931 = vmatpush1.msra.mxu0 0.0
  %932 = vmatprep.subr.mxu0 0.0
  %933 = vmatpush1.msra.mxu0 0.0
  %934 = vmatprep.subr.mxu0 0.0
  %935 = vmatpush1.msra.mxu0 0.0
  %936 = vmatprep.subr.mxu0 0.0
  %937 = vmatpush1.msra.mxu0 0.0
  %938 = vmatprep.subr.mxu0 0.0
  %939 = vmatpush1.msra.mxu0 0.0
  %940 = vmatprep.subr.mxu0 0.0
  %941 = vmatpush1.msra.mxu0 0.0
  %942 = vmatprep.subr.mxu0 0.0
  %943 = vmatpush1.msra.mxu0 0.0
  %944 = vmatprep.subr.mxu0 0.0
  %945 = vmatpush1.msra.mxu0 0.0
  %946 = vmatprep.subr.mxu0 0.0
  %947 = vmatpush1.msra.mxu0 0.0
  %948 = vmatprep.subr.mxu0 0.0
  %949 = vmatpush1.msra.mxu0 0.0
  %950 = vmatprep.subr.mxu0 0.0
  %951 = vmatpush1.msra.mxu0 0.0
  %952 = vmatprep.subr.mxu0 0.0
  %953 = vmatpush1.msra.mxu0 0.0
  %954 = vmatprep.subr.mxu0 0.0
  %955 = vmatpush1.msra.mxu0 0.0
  %956 = vmatprep.mubr.f32.mxu0 0.0
  %957 = vmatmul.mubr.f32.gmra.mrb[0].mxu0 %v34
  %v958 = vpop.f32.mrb[0].mxu0
  %v959 = vadd.f32 0.0, %v958
  %v960 = vpop.f32.mrb[0].mxu0
  %961 = vdwg.mxu0
  %v962 = vmul.f32 %v959, 0.125
  %v963 = vmul.f32 %v890, %v890
  %v964 = vsub.f32 %v962, %v963
  %v965 = vmax.f32 %v964, 0.0
  %v966 = vadd.f32 %v965, 1e-05
  %v967 = vrsqrt.pop %v966
  %v968 = vmul.f32 %v967, %v801
  %v969 = vmul.f32 %v890, %v968
  %v970 = vsub.f32 %v802, %v969
  %v971 = vlaneseq
  %v972 = vshrl.u32 %v971, 7
  %v973 = vsub.s32 0, %v972
  %v974 = vrot.slane %v968, %v973
  %v975 = vsel %vm198, %v974, 0.0
  %v976 = vsel %vm199, %v974, 0.0
  %v977 = vsel %vm200, %v974, 0.0
  %v978 = vsel %vm201, %v974, 0.0
  %v979 = vsel %vm202, %v974, 0.0
  %v980 = vsel %vm203, %v974, 0.0
  %v981 = vsel %vm204, %v974, 0.0
  %v982 = vsel %vm205, %v974, 0.0
  %v983 = vsel %vm580, %v974, 0.0
  %v984 = vsel %vm581, %v974, 0.0
  %v985 = vsel %vm582, %v974, 0.0
  %v986 = vsel %vm583, %v974, 0.0
  %v987 = vsel %vm584, %v974, 0.0
  %v988 = vsel %vm585, %v974, 0.0
  %v989 = vsel %vm586, %v974, 0.0
  %v990 = vsel %vm587, %v974, 0.0
  %991 = vadd.xlane.f32.xlu0 %v975
  %v992 = vpop.xlane.xlu0 %991
  %993 = vadd.xlane.f32.xlu0 %v976
  %v994 = vpop.xlane.xlu0 %993
  %995 = vadd.xlane.f32.xlu0 %v977
  %v996 = vpop.xlane.xlu0 %995
  %997 = vadd.xlane.f32.xlu0 %v978
  %v998 = vpop.xlane.xlu0 %997
  %999 = vadd.xlane.f32.xlu0 %v979
  %v1000 = vpop.xlane.xlu0 %999
  %1001 = vadd.xlane.f32.xlu0 %v980
  %v1002 = vpop.xlane.xlu0 %1001
  %1003 = vadd.xlane.f32.xlu0 %v981
  %v1004 = vpop.xlane.xlu0 %1003
  %1005 = vadd.xlane.f32.xlu0 %v982
  %v1006 = vpop.xlane.xlu0 %1005
  %1007 = vadd.xlane.f32.xlu0 %v983
  %v1008 = vpop.xlane.xlu0 %1007
  %1009 = vadd.xlane.f32.xlu0 %v984
  %v1010 = vpop.xlane.xlu0 %1009
  %1011 = vadd.xlane.f32.xlu0 %v985
  %v1012 = vpop.xlane.xlu0 %1011
  %1013 = vadd.xlane.f32.xlu0 %v986
  %v1014 = vpop.xlane.xlu0 %1013
  %1015 = vadd.xlane.f32.xlu0 %v987
  %v1016 = vpop.xlane.xlu0 %1015
  %1017 = vadd.xlane.f32.xlu0 %v988
  %v1018 = vpop.xlane.xlu0 %1017
  %1019 = vadd.xlane.f32.xlu0 %v989
  %v1020 = vpop.xlane.xlu0 %1019
  %1021 = vadd.xlane.f32.xlu0 %v990
  %v1022 = vpop.xlane.xlu0 %1021
  %v1023 = vmul.f32 %v992, %v804
  %v1024 = vmul.f32 %v994, %v805
  %v1025 = vmul.f32 %v996, %v806
  %v1026 = vmul.f32 %v998, %v807
  %v1027 = vmul.f32 %v1000, %v808
  %v1028 = vmul.f32 %v1002, %v809
  %v1029 = vmul.f32 %v1004, %v810
  %v1030 = vmul.f32 %v1006, %v811
  %v1031 = vmul.f32 %v1008, %v812
  %v1032 = vmul.f32 %v1010, %v813
  %v1033 = vmul.f32 %v1012, %v814
  %v1034 = vmul.f32 %v1014, %v815
  %v1035 = vmul.f32 %v1016, %v816
  %v1036 = vmul.f32 %v1018, %v817
  %v1037 = vmul.f32 %v1020, %v818
  %v1038 = vmul.f32 %v1022, %v819
  %1039 = vmatprep.subr.mxu0 0.0
  %1040 = vmatpush1.msra.mxu0 %v804
  %1041 = vmatprep.subr.mxu0 0.0
  %1042 = vmatpush1.msra.mxu0 %v805
  %1043 = vmatprep.subr.mxu0 0.0
  %1044 = vmatpush1.msra.mxu0 %v806
  %1045 = vmatprep.subr.mxu0 0.0
  %1046 = vmatpush1.msra.mxu0 %v807
  %1047 = vmatprep.subr.mxu0 0.0
  %1048 = vmatpush1.msra.mxu0 %v808
  %1049 = vmatprep.subr.mxu0 0.0
  %1050 = vmatpush1.msra.mxu0 %v809
  %1051 = vmatprep.subr.mxu0 0.0
  %1052 = vmatpush1.msra.mxu0 %v810
  %1053 = vmatprep.subr.mxu0 0.0
  %1054 = vmatpush1.msra.mxu0 %v811
  %1055 = vmatprep.subr.mxu0 0.0
  %1056 = vmatpush1.msra.mxu0 %v812
  %1057 = vmatprep.subr.mxu0 0.0
  %1058 = vmatpush1.msra.mxu0 %v813
  %1059 = vmatprep.subr.mxu0 0.0
  %1060 = vmatpush1.msra.mxu0 %v814
  %1061 = vmatprep.subr.mxu0 0.0
  %1062 = vmatpush1.msra.mxu0 %v815
  %1063 = vmatprep.subr.mxu0 0.0
  %1064 = vmatpush1.msra.mxu0 %v816
  %1065 = vmatprep.subr.mxu0 0.0
  %1066 = vmatpush1.msra.mxu0 %v817
  %1067 = vmatprep.subr.mxu0 0.0
  %1068 = vmatpush1.msra.mxu0 %v818
  %1069 = vmatprep.subr.mxu0 0.0
  %1070 = vmatpush1.msra.mxu0 %v819
  %1071 = vmatprep.subr.mxu0 0.0
  %1072 = vmatpush1.msra.mxu0 0.0
  %1073 = vmatprep.subr.mxu0 0.0
  %1074 = vmatpush1.msra.mxu0 0.0
  %1075 = vmatprep.subr.mxu0 0.0
  %1076 = vmatpush1.msra.mxu0 0.0
  %1077 = vmatprep.subr.mxu0 0.0
  %1078 = vmatpush1.msra.mxu0 0.0
  %1079 = vmatprep.subr.mxu0 0.0
  %1080 = vmatpush1.msra.mxu0 0.0
  %1081 = vmatprep.subr.mxu0 0.0
  %1082 = vmatpush1.msra.mxu0 0.0
  %1083 = vmatprep.subr.mxu0 0.0
  %1084 = vmatpush1.msra.mxu0 0.0
  %1085 = vmatprep.subr.mxu0 0.0
  %1086 = vmatpush1.msra.mxu0 0.0
  %1087 = vmatprep.subr.mxu0 0.0
  %1088 = vmatpush1.msra.mxu0 0.0
  %1089 = vmatprep.subr.mxu0 0.0
  %1090 = vmatpush1.msra.mxu0 0.0
  %1091 = vmatprep.subr.mxu0 0.0
  %1092 = vmatpush1.msra.mxu0 0.0
  %1093 = vmatprep.subr.mxu0 0.0
  %1094 = vmatpush1.msra.mxu0 0.0
  %1095 = vmatprep.subr.mxu0 0.0
  %1096 = vmatpush1.msra.mxu0 0.0
  %1097 = vmatprep.subr.mxu0 0.0
  %1098 = vmatpush1.msra.mxu0 0.0
  %1099 = vmatprep.subr.mxu0 0.0
  %1100 = vmatpush1.msra.mxu0 0.0
  %1101 = vmatprep.subr.mxu0 0.0
  %1102 = vmatpush1.msra.mxu0 0.0
  %1103 = vmatprep.mubr.f32.mxu0 0.0
  %1104 = vmatmul.mubr.f32.gmra.mrb[0].mxu0 %v970
  %v1105 = vpop.f32.mrb[0].mxu0
  %v1106 = vadd.f32 %v803, %v1105
  %v1107 = vpop.f32.mrb[0].mxu0
  %1108 = vdwg.mxu0
  %v1109 = vlaneseq
  %v1110 = vshrl.u32 %v1109, 7
  %v1111 = vsub.s32 0, %v1110
  %v1112 = vrot.slane %v1106, %v1111
  %1113 = vmatprep.subr.mxu0 0.0
  %1114 = vmatpush1.msra.mxu0 %v1023
  %1115 = vmatprep.subr.mxu0 0.0
  %1116 = vmatpush1.msra.mxu0 %v1024
  %1117 = vmatprep.subr.mxu0 0.0
  %1118 = vmatpush1.msra.mxu0 %v1025
  %1119 = vmatprep.subr.mxu0 0.0
  %1120 = vmatpush1.msra.mxu0 %v1026
  %1121 = vmatprep.subr.mxu0 0.0
  %1122 = vmatpush1.msra.mxu0 %v1027
  %1123 = vmatprep.subr.mxu0 0.0
  %1124 = vmatpush1.msra.mxu0 %v1028
  %1125 = vmatprep.subr.mxu0 0.0
  %1126 = vmatpush1.msra.mxu0 %v1029
  %1127 = vmatprep.subr.mxu0 0.0
  %1128 = vmatpush1.msra.mxu0 %v1030
  %1129 = vmatprep.subr.mxu0 0.0
  %1130 = vmatpush1.msra.mxu0 %v1031
  %1131 = vmatprep.subr.mxu0 0.0
  %1132 = vmatpush1.msra.mxu0 %v1032
  %1133 = vmatprep.subr.mxu0 0.0
  %1134 = vmatpush1.msra.mxu0 %v1033
  %1135 = vmatprep.subr.mxu0 0.0
  %1136 = vmatpush1.msra.mxu0 %v1034
  %1137 = vmatprep.subr.mxu0 0.0
  %1138 = vmatpush1.msra.mxu0 %v1035
  %1139 = vmatprep.subr.mxu0 0.0
  %1140 = vmatpush1.msra.mxu0 %v1036
  %1141 = vmatprep.subr.mxu0 0.0
  %1142 = vmatpush1.msra.mxu0 %v1037
  %1143 = vmatprep.subr.mxu0 0.0
  %1144 = vmatpush1.msra.mxu0 %v1038
  %1145 = vmatprep.subr.mxu0 0.0
  %1146 = vmatpush1.msra.mxu0 0.0
  %1147 = vmatprep.subr.mxu0 0.0
  %1148 = vmatpush1.msra.mxu0 0.0
  %1149 = vmatprep.subr.mxu0 0.0
  %1150 = vmatpush1.msra.mxu0 0.0
  %1151 = vmatprep.subr.mxu0 0.0
  %1152 = vmatpush1.msra.mxu0 0.0
  %1153 = vmatprep.subr.mxu0 0.0
  %1154 = vmatpush1.msra.mxu0 0.0
  %1155 = vmatprep.subr.mxu0 0.0
  %1156 = vmatpush1.msra.mxu0 0.0
  %1157 = vmatprep.subr.mxu0 0.0
  %1158 = vmatpush1.msra.mxu0 0.0
  %1159 = vmatprep.subr.mxu0 0.0
  %1160 = vmatpush1.msra.mxu0 0.0
  %1161 = vmatprep.subr.mxu0 0.0
  %1162 = vmatpush1.msra.mxu0 0.0
  %1163 = vmatprep.subr.mxu0 0.0
  %1164 = vmatpush1.msra.mxu0 0.0
  %1165 = vmatprep.subr.mxu0 0.0
  %1166 = vmatpush1.msra.mxu0 0.0
  %1167 = vmatprep.subr.mxu0 0.0
  %1168 = vmatpush1.msra.mxu0 0.0
  %1169 = vmatprep.subr.mxu0 0.0
  %1170 = vmatpush1.msra.mxu0 0.0
  %1171 = vmatprep.subr.mxu0 0.0
  %1172 = vmatpush1.msra.mxu0 0.0
  %1173 = vmatprep.subr.mxu0 0.0
  %1174 = vmatpush1.msra.mxu0 0.0
  %1175 = vmatprep.subr.mxu0 0.0
  %1176 = vmatpush1.msra.mxu0 0.0
  %1177 = vmatprep.mubr.f32.mxu0 0.0
  %1178 = vmatmul.mubr.f32.gmra.mrb[0].mxu0 %v800
  %v1179 = vpop.f32.mrb[0].mxu0
  %v1180 = vadd.f32 %v1112, %v1179
  %v1181 = vpop.f32.mrb[0].mxu0
  %1182 = vdwg.mxu0
  %v1183 = vtanh.pop %v1180
  %v1184 = vld [vmem:[%s4 + $0x7] sm:$0x1]
  %v1185 = vld [vmem:[%s4 + $0x8] sm:$0x1]
  %v1186 = vld [vmem:[%s4 + $0x9] sm:$0x1]
  %v1187 = vld [vmem:[%s3 + $0x100] sm:$0xff]
  %v1188 = vld [vmem:[%s3 + $0x108] sm:$0xff]
  %v1189 = vld [vmem:[%s3 + $0x110] sm:$0xff]
  %v1190 = vld [vmem:[%s3 + $0x118] sm:$0xff]
  %v1191 = vld [vmem:[%s3 + $0x120] sm:$0xff]
  %v1192 = vld [vmem:[%s3 + $0x128] sm:$0xff]
  %v1193 = vld [vmem:[%s3 + $0x130] sm:$0xff]
  %v1194 = vld [vmem:[%s3 + $0x138] sm:$0xff]
  %v1195 = vld [vmem:[%s3 + $0x140] sm:$0xff]
  %v1196 = vld [vmem:[%s3 + $0x148] sm:$0xff]
  %v1197 = vld [vmem:[%s3 + $0x150] sm:$0xff]
  %v1198 = vld [vmem:[%s3 + $0x158] sm:$0xff]
  %v1199 = vld [vmem:[%s3 + $0x160] sm:$0xff]
  %v1200 = vld [vmem:[%s3 + $0x168] sm:$0xff]
  %v1201 = vld [vmem:[%s3 + $0x170] sm:$0xff]
  %v1202 = vld [vmem:[%s3 + $0x178] sm:$0xff]
  %1203 = vmatprep.subr.mxu0 0.0
  %1204 = vmatpush1.msra.mxu0 %v1183
  %1205 = vmatprep.subr.mxu0 0.0
  %1206 = vmatpush1.msra.mxu0 0.0
  %1207 = vmatprep.subr.mxu0 0.0
  %1208 = vmatpush1.msra.mxu0 0.0
  %1209 = vmatprep.subr.mxu0 0.0
  %1210 = vmatpush1.msra.mxu0 0.0
  %1211 = vmatprep.subr.mxu0 0.0
  %1212 = vmatpush1.msra.mxu0 0.0
  %1213 = vmatprep.subr.mxu0 0.0
  %1214 = vmatpush1.msra.mxu0 0.0
  %1215 = vmatprep.subr.mxu0 0.0
  %1216 = vmatpush1.msra.mxu0 0.0
  %1217 = vmatprep.subr.mxu0 0.0
  %1218 = vmatpush1.msra.mxu0 0.0
  %1219 = vmatprep.subr.mxu0 0.0
  %1220 = vmatpush1.msra.mxu0 0.0
  %1221 = vmatprep.subr.mxu0 0.0
  %1222 = vmatpush1.msra.mxu0 0.0
  %1223 = vmatprep.subr.mxu0 0.0
  %1224 = vmatpush1.msra.mxu0 0.0
  %1225 = vmatprep.subr.mxu0 0.0
  %1226 = vmatpush1.msra.mxu0 0.0
  %1227 = vmatprep.subr.mxu0 0.0
  %1228 = vmatpush1.msra.mxu0 0.0
  %1229 = vmatprep.subr.mxu0 0.0
  %1230 = vmatpush1.msra.mxu0 0.0
  %1231 = vmatprep.subr.mxu0 0.0
  %1232 = vmatpush1.msra.mxu0 0.0
  %1233 = vmatprep.subr.mxu0 0.0
  %1234 = vmatpush1.msra.mxu0 0.0
  %1235 = vmatprep.subr.mxu0 0.0
  %1236 = vmatpush1.msra.mxu0 0.0
  %1237 = vmatprep.subr.mxu0 0.0
  %1238 = vmatpush1.msra.mxu0 0.0
  %1239 = vmatprep.subr.mxu0 0.0
  %1240 = vmatpush1.msra.mxu0 0.0
  %1241 = vmatprep.subr.mxu0 0.0
  %1242 = vmatpush1.msra.mxu0 0.0
  %1243 = vmatprep.subr.mxu0 0.0
  %1244 = vmatpush1.msra.mxu0 0.0
  %1245 = vmatprep.subr.mxu0 0.0
  %1246 = vmatpush1.msra.mxu0 0.0
  %1247 = vmatprep.subr.mxu0 0.0
  %1248 = vmatpush1.msra.mxu0 0.0
  %1249 = vmatprep.subr.mxu0 0.0
  %1250 = vmatpush1.msra.mxu0 0.0
  %1251 = vmatprep.subr.mxu0 0.0
  %1252 = vmatpush1.msra.mxu0 0.0
  %1253 = vmatprep.subr.mxu0 0.0
  %1254 = vmatpush1.msra.mxu0 0.0
  %1255 = vmatprep.subr.mxu0 0.0
  %1256 = vmatpush1.msra.mxu0 0.0
  %1257 = vmatprep.subr.mxu0 0.0
  %1258 = vmatpush1.msra.mxu0 0.0
  %1259 = vmatprep.subr.mxu0 0.0
  %1260 = vmatpush1.msra.mxu0 0.0
  %1261 = vmatprep.subr.mxu0 0.0
  %1262 = vmatpush1.msra.mxu0 0.0
  %1263 = vmatprep.subr.mxu0 0.0
  %1264 = vmatpush1.msra.mxu0 0.0
  %1265 = vmatprep.subr.mxu0 0.0
  %1266 = vmatpush1.msra.mxu0 0.0
  %1267 = vmatprep.mubr.f32.mxu0 0.0
  %1268 = vmatmul.mubr.f32.gmra.mrb[0].mxu0 %v34
  %v1269 = vpop.f32.mrb[0].mxu0
  %v1270 = vadd.f32 0.0, %v1269
  %v1271 = vpop.f32.mrb[0].mxu0
  %1272 = vdwg.mxu0
  %v1273 = vmul.f32 %v1270, 0.125
  %v1274 = vmul.f32 %v1183, %v1183
  %1275 = vmatprep.subr.mxu0 0.0
  %1276 = vmatpush1.msra.mxu0 %v1274
  %1277 = vmatprep.subr.mxu0 0.0
  %1278 = vmatpush1.msra.mxu0 0.0
  %1279 = vmatprep.subr.mxu0 0.0
  %1280 = vmatpush1.msra.mxu0 0.0
  %1281 = vmatprep.subr.mxu0 0.0
  %1282 = vmatpush1.msra.mxu0 0.0
  %1283 = vmatprep.subr.mxu0 0.0
  %1284 = vmatpush1.msra.mxu0 0.0
  %1285 = vmatprep.subr.mxu0 0.0
  %1286 = vmatpush1.msra.mxu0 0.0
  %1287 = vmatprep.subr.mxu0 0.0
  %1288 = vmatpush1.msra.mxu0 0.0
  %1289 = vmatprep.subr.mxu0 0.0
  %1290 = vmatpush1.msra.mxu0 0.0
  %1291 = vmatprep.subr.mxu0 0.0
  %1292 = vmatpush1.msra.mxu0 0.0
  %1293 = vmatprep.subr.mxu0 0.0
  %1294 = vmatpush1.msra.mxu0 0.0
  %1295 = vmatprep.subr.mxu0 0.0
  %1296 = vmatpush1.msra.mxu0 0.0
  %1297 = vmatprep.subr.mxu0 0.0
  %1298 = vmatpush1.msra.mxu0 0.0
  %1299 = vmatprep.subr.mxu0 0.0
  %1300 = vmatpush1.msra.mxu0 0.0
  %1301 = vmatprep.subr.mxu0 0.0
  %1302 = vmatpush1.msra.mxu0 0.0
  %1303 = vmatprep.subr.mxu0 0.0
  %1304 = vmatpush1.msra.mxu0 0.0
  %1305 = vmatprep.subr.mxu0 0.0
  %1306 = vmatpush1.msra.mxu0 0.0
  %1307 = vmatprep.subr.mxu0 0.0
  %1308 = vmatpush1.msra.mxu0 0.0
  %1309 = vmatprep.subr.mxu0 0.0
  %1310 = vmatpush1.msra.mxu0 0.0
  %1311 = vmatprep.subr.mxu0 0.0
  %1312 = vmatpush1.msra.mxu0 0.0
  %1313 = vmatprep.subr.mxu0 0.0
  %1314 = vmatpush1.msra.mxu0 0.0
  %1315 = vmatprep.subr.mxu0 0.0
  %1316 = vmatpush1.msra.mxu0 0.0
  %1317 = vmatprep.subr.mxu0 0.0
  %1318 = vmatpush1.msra.mxu0 0.0
  %1319 = vmatprep.subr.mxu0 0.0
  %1320 = vmatpush1.msra.mxu0 0.0
  %1321 = vmatprep.subr.mxu0 0.0
  %1322 = vmatpush1.msra.mxu0 0.0
  %1323 = vmatprep.subr.mxu0 0.0
  %1324 = vmatpush1.msra.mxu0 0.0
  %1325 = vmatprep.subr.mxu0 0.0
  %1326 = vmatpush1.msra.mxu0 0.0
  %1327 = vmatprep.subr.mxu0 0.0
  %1328 = vmatpush1.msra.mxu0 0.0
  %1329 = vmatprep.subr.mxu0 0.0
  %1330 = vmatpush1.msra.mxu0 0.0
  %1331 = vmatprep.subr.mxu0 0.0
  %1332 = vmatpush1.msra.mxu0 0.0
  %1333 = vmatprep.subr.mxu0 0.0
  %1334 = vmatpush1.msra.mxu0 0.0
  %1335 = vmatprep.subr.mxu0 0.0
  %1336 = vmatpush1.msra.mxu0 0.0
  %1337 = vmatprep.subr.mxu0 0.0
  %1338 = vmatpush1.msra.mxu0 0.0
  %1339 = vmatprep.mubr.f32.mxu0 0.0
  %1340 = vmatmul.mubr.f32.gmra.mrb[0].mxu0 %v34
  %v1341 = vpop.f32.mrb[0].mxu0
  %v1342 = vadd.f32 0.0, %v1341
  %v1343 = vpop.f32.mrb[0].mxu0
  %1344 = vdwg.mxu0
  %v1345 = vmul.f32 %v1342, 0.125
  %v1346 = vmul.f32 %v1273, %v1273
  %v1347 = vsub.f32 %v1345, %v1346
  %v1348 = vmax.f32 %v1347, 0.0
  %v1349 = vadd.f32 %v1348, 1e-05
  %v1350 = vrsqrt.pop %v1349
  %v1351 = vmul.f32 %v1350, %v1184
  %v1352 = vmul.f32 %v1273, %v1351
  %v1353 = vsub.f32 %v1185, %v1352
  %v1354 = vlaneseq
  %v1355 = vshrl.u32 %v1354, 7
  %v1356 = vsub.s32 0, %v1355
  %v1357 = vrot.slane %v1351, %v1356
  %v1358 = vsel %vm198, %v1357, 0.0
  %v1359 = vsel %vm199, %v1357, 0.0
  %v1360 = vsel %vm200, %v1357, 0.0
  %v1361 = vsel %vm201, %v1357, 0.0
  %v1362 = vsel %vm202, %v1357, 0.0
  %v1363 = vsel %vm203, %v1357, 0.0
  %v1364 = vsel %vm204, %v1357, 0.0
  %v1365 = vsel %vm205, %v1357, 0.0
  %v1366 = vsel %vm580, %v1357, 0.0
  %v1367 = vsel %vm581, %v1357, 0.0
  %v1368 = vsel %vm582, %v1357, 0.0
  %v1369 = vsel %vm583, %v1357, 0.0
  %v1370 = vsel %vm584, %v1357, 0.0
  %v1371 = vsel %vm585, %v1357, 0.0
  %v1372 = vsel %vm586, %v1357, 0.0
  %v1373 = vsel %vm587, %v1357, 0.0
  %1374 = vadd.xlane.f32.xlu0 %v1358
  %v1375 = vpop.xlane.xlu0 %1374
  %1376 = vadd.xlane.f32.xlu0 %v1359
  %v1377 = vpop.xlane.xlu0 %1376
  %1378 = vadd.xlane.f32.xlu0 %v1360
  %v1379 = vpop.xlane.xlu0 %1378
  %1380 = vadd.xlane.f32.xlu0 %v1361
  %v1381 = vpop.xlane.xlu0 %1380
  %1382 = vadd.xlane.f32.xlu0 %v1362
  %v1383 = vpop.xlane.xlu0 %1382
  %1384 = vadd.xlane.f32.xlu0 %v1363
  %v1385 = vpop.xlane.xlu0 %1384
  %1386 = vadd.xlane.f32.xlu0 %v1364
  %v1387 = vpop.xlane.xlu0 %1386
  %1388 = vadd.xlane.f32.xlu0 %v1365
  %v1389 = vpop.xlane.xlu0 %1388
  %1390 = vadd.xlane.f32.xlu0 %v1366
  %v1391 = vpop.xlane.xlu0 %1390
  %1392 = vadd.xlane.f32.xlu0 %v1367
  %v1393 = vpop.xlane.xlu0 %1392
  %1394 = vadd.xlane.f32.xlu0 %v1368
  %v1395 = vpop.xlane.xlu0 %1394
  %1396 = vadd.xlane.f32.xlu0 %v1369
  %v1397 = vpop.xlane.xlu0 %1396
  %1398 = vadd.xlane.f32.xlu0 %v1370
  %v1399 = vpop.xlane.xlu0 %1398
  %1400 = vadd.xlane.f32.xlu0 %v1371
  %v1401 = vpop.xlane.xlu0 %1400
  %1402 = vadd.xlane.f32.xlu0 %v1372
  %v1403 = vpop.xlane.xlu0 %1402
  %1404 = vadd.xlane.f32.xlu0 %v1373
  %v1405 = vpop.xlane.xlu0 %1404
  %v1406 = vmul.f32 %v1375, %v1187
  %v1407 = vmul.f32 %v1377, %v1188
  %v1408 = vmul.f32 %v1379, %v1189
  %v1409 = vmul.f32 %v1381, %v1190
  %v1410 = vmul.f32 %v1383, %v1191
  %v1411 = vmul.f32 %v1385, %v1192
  %v1412 = vmul.f32 %v1387, %v1193
  %v1413 = vmul.f32 %v1389, %v1194
  %v1414 = vmul.f32 %v1391, %v1195
  %v1415 = vmul.f32 %v1393, %v1196
  %v1416 = vmul.f32 %v1395, %v1197
  %v1417 = vmul.f32 %v1397, %v1198
  %v1418 = vmul.f32 %v1399, %v1199
  %v1419 = vmul.f32 %v1401, %v1200
  %v1420 = vmul.f32 %v1403, %v1201
  %v1421 = vmul.f32 %v1405, %v1202
  %1422 = vmatprep.subr.mxu0 0.0
  %1423 = vmatpush1.msra.mxu0 %v1187
  %1424 = vmatprep.subr.mxu0 0.0
  %1425 = vmatpush1.msra.mxu0 %v1188
  %1426 = vmatprep.subr.mxu0 0.0
  %1427 = vmatpush1.msra.mxu0 %v1189
  %1428 = vmatprep.subr.mxu0 0.0
  %1429 = vmatpush1.msra.mxu0 %v1190
  %1430 = vmatprep.subr.mxu0 0.0
  %1431 = vmatpush1.msra.mxu0 %v1191
  %1432 = vmatprep.subr.mxu0 0.0
  %1433 = vmatpush1.msra.mxu0 %v1192
  %1434 = vmatprep.subr.mxu0 0.0
  %1435 = vmatpush1.msra.mxu0 %v1193
  %1436 = vmatprep.subr.mxu0 0.0
  %1437 = vmatpush1.msra.mxu0 %v1194
  %1438 = vmatprep.subr.mxu0 0.0
  %1439 = vmatpush1.msra.mxu0 %v1195
  %1440 = vmatprep.subr.mxu0 0.0
  %1441 = vmatpush1.msra.mxu0 %v1196
  %1442 = vmatprep.subr.mxu0 0.0
  %1443 = vmatpush1.msra.mxu0 %v1197
  %1444 = vmatprep.subr.mxu0 0.0
  %1445 = vmatpush1.msra.mxu0 %v1198
  %1446 = vmatprep.subr.mxu0 0.0
  %1447 = vmatpush1.msra.mxu0 %v1199
  %1448 = vmatprep.subr.mxu0 0.0
  %1449 = vmatpush1.msra.mxu0 %v1200
  %1450 = vmatprep.subr.mxu0 0.0
  %1451 = vmatpush1.msra.mxu0 %v1201
  %1452 = vmatprep.subr.mxu0 0.0
  %1453 = vmatpush1.msra.mxu0 %v1202
  %1454 = vmatprep.subr.mxu0 0.0
  %1455 = vmatpush1.msra.mxu0 0.0
  %1456 = vmatprep.subr.mxu0 0.0
  %1457 = vmatpush1.msra.mxu0 0.0
  %1458 = vmatprep.subr.mxu0 0.0
  %1459 = vmatpush1.msra.mxu0 0.0
  %1460 = vmatprep.subr.mxu0 0.0
  %1461 = vmatpush1.msra.mxu0 0.0
  %1462 = vmatprep.subr.mxu0 0.0
  %1463 = vmatpush1.msra.mxu0 0.0
  %1464 = vmatprep.subr.mxu0 0.0
  %1465 = vmatpush1.msra.mxu0 0.0
  %1466 = vmatprep.subr.mxu0 0.0
  %1467 = vmatpush1.msra.mxu0 0.0
  %1468 = vmatprep.subr.mxu0 0.0
  %1469 = vmatpush1.msra.mxu0 0.0
  %1470 = vmatprep.subr.mxu0 0.0
  %1471 = vmatpush1.msra.mxu0 0.0
  %1472 = vmatprep.subr.mxu0 0.0
  %1473 = vmatpush1.msra.mxu0 0.0
  %1474 = vmatprep.subr.mxu0 0.0
  %1475 = vmatpush1.msra.mxu0 0.0
  %1476 = vmatprep.subr.mxu0 0.0
  %1477 = vmatpush1.msra.mxu0 0.0
  %1478 = vmatprep.subr.mxu0 0.0
  %1479 = vmatpush1.msra.mxu0 0.0
  %1480 = vmatprep.subr.mxu0 0.0
  %1481 = vmatpush1.msra.mxu0 0.0
  %1482 = vmatprep.subr.mxu0 0.0
  %1483 = vmatpush1.msra.mxu0 0.0
  %1484 = vmatprep.subr.mxu0 0.0
  %1485 = vmatpush1.msra.mxu0 0.0
  %1486 = vmatprep.mubr.f32.mxu0 0.0
  %1487 = vmatmul.mubr.f32.gmra.mrb[0].mxu0 %v1353
  %v1488 = vpop.f32.mrb[0].mxu0
  %v1489 = vadd.f32 %v1186, %v1488
  %v1490 = vpop.f32.mrb[0].mxu0
  %1491 = vdwg.mxu0
  %v1492 = vlaneseq
  %v1493 = vshrl.u32 %v1492, 7
  %v1494 = vsub.s32 0, %v1493
  %v1495 = vrot.slane %v1489, %v1494
  %1496 = vmatprep.subr.mxu0 0.0
  %1497 = vmatpush1.msra.mxu0 %v1406
  %1498 = vmatprep.subr.mxu0 0.0
  %1499 = vmatpush1.msra.mxu0 %v1407
  %1500 = vmatprep.subr.mxu0 0.0
  %1501 = vmatpush1.msra.mxu0 %v1408
  %1502 = vmatprep.subr.mxu0 0.0
  %1503 = vmatpush1.msra.mxu0 %v1409
  %1504 = vmatprep.subr.mxu0 0.0
  %1505 = vmatpush1.msra.mxu0 %v1410
  %1506 = vmatprep.subr.mxu0 0.0
  %1507 = vmatpush1.msra.mxu0 %v1411
  %1508 = vmatprep.subr.mxu0 0.0
  %1509 = vmatpush1.msra.mxu0 %v1412
  %1510 = vmatprep.subr.mxu0 0.0
  %1511 = vmatpush1.msra.mxu0 %v1413
  %1512 = vmatprep.subr.mxu0 0.0
  %1513 = vmatpush1.msra.mxu0 %v1414
  %1514 = vmatprep.subr.mxu0 0.0
  %1515 = vmatpush1.msra.mxu0 %v1415
  %1516 = vmatprep.subr.mxu0 0.0
  %1517 = vmatpush1.msra.mxu0 %v1416
  %1518 = vmatprep.subr.mxu0 0.0
  %1519 = vmatpush1.msra.mxu0 %v1417
  %1520 = vmatprep.subr.mxu0 0.0
  %1521 = vmatpush1.msra.mxu0 %v1418
  %1522 = vmatprep.subr.mxu0 0.0
  %1523 = vmatpush1.msra.mxu0 %v1419
  %1524 = vmatprep.subr.mxu0 0.0
  %1525 = vmatpush1.msra.mxu0 %v1420
  %1526 = vmatprep.subr.mxu0 0.0
  %1527 = vmatpush1.msra.mxu0 %v1421
  %1528 = vmatprep.subr.mxu0 0.0
  %1529 = vmatpush1.msra.mxu0 0.0
  %1530 = vmatprep.subr.mxu0 0.0
  %1531 = vmatpush1.msra.mxu0 0.0
  %1532 = vmatprep.subr.mxu0 0.0
  %1533 = vmatpush1.msra.mxu0 0.0
  %1534 = vmatprep.subr.mxu0 0.0
  %1535 = vmatpush1.msra.mxu0 0.0
  %1536 = vmatprep.subr.mxu0 0.0
  %1537 = vmatpush1.msra.mxu0 0.0
  %1538 = vmatprep.subr.mxu0 0.0
  %1539 = vmatpush1.msra.mxu0 0.0
  %1540 = vmatprep.subr.mxu0 0.0
  %1541 = vmatpush1.msra.mxu0 0.0
  %1542 = vmatprep.subr.mxu0 0.0
  %1543 = vmatpush1.msra.mxu0 0.0
  %1544 = vmatprep.subr.mxu0 0.0
  %1545 = vmatpush1.msra.mxu0 0.0
  %1546 = vmatprep.subr.mxu0 0.0
  %1547 = vmatpush1.msra.mxu0 0.0
  %1548 = vmatprep.subr.mxu0 0.0
  %1549 = vmatpush1.msra.mxu0 0.0
  %1550 = vmatprep.subr.mxu0 0.0
  %1551 = vmatpush1.msra.mxu0 0.0
  %1552 = vmatprep.subr.mxu0 0.0
  %1553 = vmatpush1.msra.mxu0 0.0
  %1554 = vmatprep.subr.mxu0 0.0
  %1555 = vmatpush1.msra.mxu0 0.0
  %1556 = vmatprep.subr.mxu0 0.0
  %1557 = vmatpush1.msra.mxu0 0.0
  %1558 = vmatprep.subr.mxu0 0.0
  %1559 = vmatpush1.msra.mxu0 0.0
  %1560 = vmatprep.mubr.f32.mxu0 0.0
  %1561 = vmatmul.mubr.f32.gmra.mrb[0].mxu0 %v1183
  %v1562 = vpop.f32.mrb[0].mxu0
  %v1563 = vadd.f32 %v1495, %v1562
  %v1564 = vpop.f32.mrb[0].mxu0
  %1565 = vdwg.mxu0
  %v1566 = vtanh.pop %v1563
  %v1567 = vld [vmem:[%s4 + $0xa] sm:$0x1]
  %v1568 = vld [vmem:[%s4 + $0xb] sm:$0x1]
  %v1569 = vld [vmem:[%s4 + $0xc] sm:$0x1]
  %v1570 = vld [vmem:[%s3 + $0x180] sm:$0xff]
  %v1571 = vld [vmem:[%s3 + $0x188] sm:$0xff]
  %v1572 = vld [vmem:[%s3 + $0x190] sm:$0xff]
  %v1573 = vld [vmem:[%s3 + $0x198] sm:$0xff]
  %v1574 = vld [vmem:[%s3 + $0x1a0] sm:$0xff]
  %v1575 = vld [vmem:[%s3 + $0x1a8] sm:$0xff]
  %v1576 = vld [vmem:[%s3 + $0x1b0] sm:$0xff]
  %v1577 = vld [vmem:[%s3 + $0x1b8] sm:$0xff]
  %v1578 = vld [vmem:[%s3 + $0x1c0] sm:$0xff]
  %v1579 = vld [vmem:[%s3 + $0x1c8] sm:$0xff]
  %v1580 = vld [vmem:[%s3 + $0x1d0] sm:$0xff]
  %v1581 = vld [vmem:[%s3 + $0x1d8] sm:$0xff]
  %v1582 = vld [vmem:[%s3 + $0x1e0] sm:$0xff]
  %v1583 = vld [vmem:[%s3 + $0x1e8] sm:$0xff]
  %v1584 = vld [vmem:[%s3 + $0x1f0] sm:$0xff]
  %v1585 = vld [vmem:[%s3 + $0x1f8] sm:$0xff]
  %1586 = vmatprep.subr.mxu0 0.0
  %1587 = vmatpush1.msra.mxu0 %v1566
  %1588 = vmatprep.subr.mxu0 0.0
  %1589 = vmatpush1.msra.mxu0 0.0
  %1590 = vmatprep.subr.mxu0 0.0
  %1591 = vmatpush1.msra.mxu0 0.0
  %1592 = vmatprep.subr.mxu0 0.0
  %1593 = vmatpush1.msra.mxu0 0.0
  %1594 = vmatprep.subr.mxu0 0.0
  %1595 = vmatpush1.msra.mxu0 0.0
  %1596 = vmatprep.subr.mxu0 0.0
  %1597 = vmatpush1.msra.mxu0 0.0
  %1598 = vmatprep.subr.mxu0 0.0
  %1599 = vmatpush1.msra.mxu0 0.0
  %1600 = vmatprep.subr.mxu0 0.0
  %1601 = vmatpush1.msra.mxu0 0.0
  %1602 = vmatprep.subr.mxu0 0.0
  %1603 = vmatpush1.msra.mxu0 0.0
  %1604 = vmatprep.subr.mxu0 0.0
  %1605 = vmatpush1.msra.mxu0 0.0
  %1606 = vmatprep.subr.mxu0 0.0
  %1607 = vmatpush1.msra.mxu0 0.0
  %1608 = vmatprep.subr.mxu0 0.0
  %1609 = vmatpush1.msra.mxu0 0.0
  %1610 = vmatprep.subr.mxu0 0.0
  %1611 = vmatpush1.msra.mxu0 0.0
  %1612 = vmatprep.subr.mxu0 0.0
  %1613 = vmatpush1.msra.mxu0 0.0
  %1614 = vmatprep.subr.mxu0 0.0
  %1615 = vmatpush1.msra.mxu0 0.0
  %1616 = vmatprep.subr.mxu0 0.0
  %1617 = vmatpush1.msra.mxu0 0.0
  %1618 = vmatprep.subr.mxu0 0.0
  %1619 = vmatpush1.msra.mxu0 0.0
  %1620 = vmatprep.subr.mxu0 0.0
  %1621 = vmatpush1.msra.mxu0 0.0
  %1622 = vmatprep.subr.mxu0 0.0
  %1623 = vmatpush1.msra.mxu0 0.0
  %1624 = vmatprep.subr.mxu0 0.0
  %1625 = vmatpush1.msra.mxu0 0.0
  %1626 = vmatprep.subr.mxu0 0.0
  %1627 = vmatpush1.msra.mxu0 0.0
  %1628 = vmatprep.subr.mxu0 0.0
  %1629 = vmatpush1.msra.mxu0 0.0
  %1630 = vmatprep.subr.mxu0 0.0
  %1631 = vmatpush1.msra.mxu0 0.0
  %1632 = vmatprep.subr.mxu0 0.0
  %1633 = vmatpush1.msra.mxu0 0.0
  %1634 = vmatprep.subr.mxu0 0.0
  %1635 = vmatpush1.msra.mxu0 0.0
  %1636 = vmatprep.subr.mxu0 0.0
  %1637 = vmatpush1.msra.mxu0 0.0
  %1638 = vmatprep.subr.mxu0 0.0
  %1639 = vmatpush1.msra.mxu0 0.0
  %1640 = vmatprep.subr.mxu0 0.0
  %1641 = vmatpush1.msra.mxu0 0.0
  %1642 = vmatprep.subr.mxu0 0.0
  %1643 = vmatpush1.msra.mxu0 0.0
  %1644 = vmatprep.subr.mxu0 0.0
  %1645 = vmatpush1.msra.mxu0 0.0
  %1646 = vmatprep.subr.mxu0 0.0
  %1647 = vmatpush1.msra.mxu0 0.0
  %1648 = vmatprep.subr.mxu0 0.0
  %1649 = vmatpush1.msra.mxu0 0.0
  %1650 = vmatprep.mubr.f32.mxu0 0.0
  %1651 = vmatmul.mubr.f32.gmra.mrb[0].mxu0 %v34
  %v1652 = vpop.f32.mrb[0].mxu0
  %v1653 = vadd.f32 0.0, %v1652
  %v1654 = vpop.f32.mrb[0].mxu0
  %1655 = vdwg.mxu0
  %v1656 = vmul.f32 %v1653, 0.125
  %v1657 = vmul.f32 %v1566, %v1566
  %1658 = vmatprep.subr.mxu0 0.0
  %1659 = vmatpush1.msra.mxu0 %v1657
  %1660 = vmatprep.subr.mxu0 0.0
  %1661 = vmatpush1.msra.mxu0 0.0
  %1662 = vmatprep.subr.mxu0 0.0
  %1663 = vmatpush1.msra.mxu0 0.0
  %1664 = vmatprep.subr.mxu0 0.0
  %1665 = vmatpush1.msra.mxu0 0.0
  %1666 = vmatprep.subr.mxu0 0.0
  %1667 = vmatpush1.msra.mxu0 0.0
  %1668 = vmatprep.subr.mxu0 0.0
  %1669 = vmatpush1.msra.mxu0 0.0
  %1670 = vmatprep.subr.mxu0 0.0
  %1671 = vmatpush1.msra.mxu0 0.0
  %1672 = vmatprep.subr.mxu0 0.0
  %1673 = vmatpush1.msra.mxu0 0.0
  %1674 = vmatprep.subr.mxu0 0.0
  %1675 = vmatpush1.msra.mxu0 0.0
  %1676 = vmatprep.subr.mxu0 0.0
  %1677 = vmatpush1.msra.mxu0 0.0
  %1678 = vmatprep.subr.mxu0 0.0
  %1679 = vmatpush1.msra.mxu0 0.0
  %1680 = vmatprep.subr.mxu0 0.0
  %1681 = vmatpush1.msra.mxu0 0.0
  %1682 = vmatprep.subr.mxu0 0.0
  %1683 = vmatpush1.msra.mxu0 0.0
  %1684 = vmatprep.subr.mxu0 0.0
  %1685 = vmatpush1.msra.mxu0 0.0
  %1686 = vmatprep.subr.mxu0 0.0
  %1687 = vmatpush1.msra.mxu0 0.0
  %1688 = vmatprep.subr.mxu0 0.0
  %1689 = vmatpush1.msra.mxu0 0.0
  %1690 = vmatprep.subr.mxu0 0.0
  %1691 = vmatpush1.msra.mxu0 0.0
  %1692 = vmatprep.subr.mxu0 0.0
  %1693 = vmatpush1.msra.mxu0 0.0
  %1694 = vmatprep.subr.mxu0 0.0
  %1695 = vmatpush1.msra.mxu0 0.0
  %1696 = vmatprep.subr.mxu0 0.0
  %1697 = vmatpush1.msra.mxu0 0.0
  %1698 = vmatprep.subr.mxu0 0.0
  %1699 = vmatpush1.msra.mxu0 0.0
  %1700 = vmatprep.subr.mxu0 0.0
  %1701 = vmatpush1.msra.mxu0 0.0
  %1702 = vmatprep.subr.mxu0 0.0
  %1703 = vmatpush1.msra.mxu0 0.0
  %1704 = vmatprep.subr.mxu0 0.0
  %1705 = vmatpush1.msra.mxu0 0.0
  %1706 = vmatprep.subr.mxu0 0.0
  %1707 = vmatpush1.msra.mxu0 0.0
  %1708 = vmatprep.subr.mxu0 0.0
  %1709 = vmatpush1.msra.mxu0 0.0
  %1710 = vmatprep.subr.mxu0 0.0
  %1711 = vmatpush1.msra.mxu0 0.0
  %1712 = vmatprep.subr.mxu0 0.0
  %1713 = vmatpush1.msra.mxu0 0.0
  %1714 = vmatprep.subr.mxu0 0.0
  %1715 = vmatpush1.msra.mxu0 0.0
  %1716 = vmatprep.subr.mxu0 0.0
  %1717 = vmatpush1.msra.mxu0 0.0
  %1718 = vmatprep.subr.mxu0 0.0
  %1719 = vmatpush1.msra.mxu0 0.0
  %1720 = vmatprep.subr.mxu0 0.0
  %1721 = vmatpush1.msra.mxu0 0.0
  %1722 = vmatprep.mubr.f32.mxu0 0.0
  %1723 = vmatmul.mubr.f32.gmra.mrb[0].mxu0 %v34
  %v1724 = vpop.f32.mrb[0].mxu0
  %v1725 = vadd.f32 0.0, %v1724
  %v1726 = vpop.f32.mrb[0].mxu0
  %1727 = vdwg.mxu0
  %v1728 = vmul.f32 %v1725, 0.125
  %v1729 = vmul.f32 %v1656, %v1656
  %v1730 = vsub.f32 %v1728, %v1729
  %v1731 = vmax.f32 %v1730, 0.0
  %v1732 = vadd.f32 %v1731, 1e-05
  %v1733 = vrsqrt.pop %v1732
  %v1734 = vmul.f32 %v1733, %v1567
  %v1735 = vmul.f32 %v1656, %v1734
  %v1736 = vsub.f32 %v1568, %v1735
  %v1737 = vlaneseq
  %v1738 = vshrl.u32 %v1737, 7
  %v1739 = vsub.s32 0, %v1738
  %v1740 = vrot.slane %v1734, %v1739
  %v1741 = vsel %vm198, %v1740, 0.0
  %v1742 = vsel %vm199, %v1740, 0.0
  %v1743 = vsel %vm200, %v1740, 0.0
  %v1744 = vsel %vm201, %v1740, 0.0
  %v1745 = vsel %vm202, %v1740, 0.0
  %v1746 = vsel %vm203, %v1740, 0.0
  %v1747 = vsel %vm204, %v1740, 0.0
  %v1748 = vsel %vm205, %v1740, 0.0
  %v1749 = vsel %vm580, %v1740, 0.0
  %v1750 = vsel %vm581, %v1740, 0.0
  %v1751 = vsel %vm582, %v1740, 0.0
  %v1752 = vsel %vm583, %v1740, 0.0
  %v1753 = vsel %vm584, %v1740, 0.0
  %v1754 = vsel %vm585, %v1740, 0.0
  %v1755 = vsel %vm586, %v1740, 0.0
  %v1756 = vsel %vm587, %v1740, 0.0
  %1757 = vadd.xlane.f32.xlu0 %v1741
  %v1758 = vpop.xlane.xlu0 %1757
  %1759 = vadd.xlane.f32.xlu0 %v1742
  %v1760 = vpop.xlane.xlu0 %1759
  %1761 = vadd.xlane.f32.xlu0 %v1743
  %v1762 = vpop.xlane.xlu0 %1761
  %1763 = vadd.xlane.f32.xlu0 %v1744
  %v1764 = vpop.xlane.xlu0 %1763
  %1765 = vadd.xlane.f32.xlu0 %v1745
  %v1766 = vpop.xlane.xlu0 %1765
  %1767 = vadd.xlane.f32.xlu0 %v1746
  %v1768 = vpop.xlane.xlu0 %1767
  %1769 = vadd.xlane.f32.xlu0 %v1747
  %v1770 = vpop.xlane.xlu0 %1769
  %1771 = vadd.xlane.f32.xlu0 %v1748
  %v1772 = vpop.xlane.xlu0 %1771
  %1773 = vadd.xlane.f32.xlu0 %v1749
  %v1774 = vpop.xlane.xlu0 %1773
  %1775 = vadd.xlane.f32.xlu0 %v1750
  %v1776 = vpop.xlane.xlu0 %1775
  %1777 = vadd.xlane.f32.xlu0 %v1751
  %v1778 = vpop.xlane.xlu0 %1777
  %1779 = vadd.xlane.f32.xlu0 %v1752
  %v1780 = vpop.xlane.xlu0 %1779
  %1781 = vadd.xlane.f32.xlu0 %v1753
  %v1782 = vpop.xlane.xlu0 %1781
  %1783 = vadd.xlane.f32.xlu0 %v1754
  %v1784 = vpop.xlane.xlu0 %1783
  %1785 = vadd.xlane.f32.xlu0 %v1755
  %v1786 = vpop.xlane.xlu0 %1785
  %1787 = vadd.xlane.f32.xlu0 %v1756
  %v1788 = vpop.xlane.xlu0 %1787
  %v1789 = vmul.f32 %v1758, %v1570
  %v1790 = vmul.f32 %v1760, %v1571
  %v1791 = vmul.f32 %v1762, %v1572
  %v1792 = vmul.f32 %v1764, %v1573
  %v1793 = vmul.f32 %v1766, %v1574
  %v1794 = vmul.f32 %v1768, %v1575
  %v1795 = vmul.f32 %v1770, %v1576
  %v1796 = vmul.f32 %v1772, %v1577
  %v1797 = vmul.f32 %v1774, %v1578
  %v1798 = vmul.f32 %v1776, %v1579
  %v1799 = vmul.f32 %v1778, %v1580
  %v1800 = vmul.f32 %v1780, %v1581
  %v1801 = vmul.f32 %v1782, %v1582
  %v1802 = vmul.f32 %v1784, %v1583
  %v1803 = vmul.f32 %v1786, %v1584
  %v1804 = vmul.f32 %v1788, %v1585
  %1805 = vmatprep.subr.mxu0 0.0
  %1806 = vmatpush1.msra.mxu0 %v1570
  %1807 = vmatprep.subr.mxu0 0.0
  %1808 = vmatpush1.msra.mxu0 %v1571
  %1809 = vmatprep.subr.mxu0 0.0
  %1810 = vmatpush1.msra.mxu0 %v1572
  %1811 = vmatprep.subr.mxu0 0.0
  %1812 = vmatpush1.msra.mxu0 %v1573
  %1813 = vmatprep.subr.mxu0 0.0
  %1814 = vmatpush1.msra.mxu0 %v1574
  %1815 = vmatprep.subr.mxu0 0.0
  %1816 = vmatpush1.msra.mxu0 %v1575
  %1817 = vmatprep.subr.mxu0 0.0
  %1818 = vmatpush1.msra.mxu0 %v1576
  %1819 = vmatprep.subr.mxu0 0.0
  %1820 = vmatpush1.msra.mxu0 %v1577
  %1821 = vmatprep.subr.mxu0 0.0
  %1822 = vmatpush1.msra.mxu0 %v1578
  %1823 = vmatprep.subr.mxu0 0.0
  %1824 = vmatpush1.msra.mxu0 %v1579
  %1825 = vmatprep.subr.mxu0 0.0
  %1826 = vmatpush1.msra.mxu0 %v1580
  %1827 = vmatprep.subr.mxu0 0.0
  %1828 = vmatpush1.msra.mxu0 %v1581
  %1829 = vmatprep.subr.mxu0 0.0
  %1830 = vmatpush1.msra.mxu0 %v1582
  %1831 = vmatprep.subr.mxu0 0.0
  %1832 = vmatpush1.msra.mxu0 %v1583
  %1833 = vmatprep.subr.mxu0 0.0
  %1834 = vmatpush1.msra.mxu0 %v1584
  %1835 = vmatprep.subr.mxu0 0.0
  %1836 = vmatpush1.msra.mxu0 %v1585
  %1837 = vmatprep.subr.mxu0 0.0
  %1838 = vmatpush1.msra.mxu0 0.0
  %1839 = vmatprep.subr.mxu0 0.0
  %1840 = vmatpush1.msra.mxu0 0.0
  %1841 = vmatprep.subr.mxu0 0.0
  %1842 = vmatpush1.msra.mxu0 0.0
  %1843 = vmatprep.subr.mxu0 0.0
  %1844 = vmatpush1.msra.mxu0 0.0
  %1845 = vmatprep.subr.mxu0 0.0
  %1846 = vmatpush1.msra.mxu0 0.0
  %1847 = vmatprep.subr.mxu0 0.0
  %1848 = vmatpush1.msra.mxu0 0.0
  %1849 = vmatprep.subr.mxu0 0.0
  %1850 = vmatpush1.msra.mxu0 0.0
  %1851 = vmatprep.subr.mxu0 0.0
  %1852 = vmatpush1.msra.mxu0 0.0
  %1853 = vmatprep.subr.mxu0 0.0
  %1854 = vmatpush1.msra.mxu0 0.0
  %1855 = vmatprep.subr.mxu0 0.0
  %1856 = vmatpush1.msra.mxu0 0.0
  %1857 = vmatprep.subr.mxu0 0.0
  %1858 = vmatpush1.msra.mxu0 0.0
  %1859 = vmatprep.subr.mxu0 0.0
  %1860 = vmatpush1.msra.mxu0 0.0
  %1861 = vmatprep.subr.mxu0 0.0
  %1862 = vmatpush1.msra.mxu0 0.0
  %1863 = vmatprep.subr.mxu0 0.0
  %1864 = vmatpush1.msra.mxu0 0.0
  %1865 = vmatprep.subr.mxu0 0.0
  %1866 = vmatpush1.msra.mxu0 0.0
  %1867 = vmatprep.subr.mxu0 0.0
  %1868 = vmatpush1.msra.mxu0 0.0
  %1869 = vmatprep.mubr.f32.mxu0 0.0
  %1870 = vmatmul.mubr.f32.gmra.mrb[0].mxu0 %v1736
  %v1871 = vpop.f32.mrb[0].mxu0
  %v1872 = vadd.f32 %v1569, %v1871
  %v1873 = vpop.f32.mrb[0].mxu0
  %1874 = vdwg.mxu0
  %v1875 = vlaneseq
  %v1876 = vshrl.u32 %v1875, 7
  %v1877 = vsub.s32 0, %v1876
  %v1878 = vrot.slane %v1872, %v1877
  %1879 = vmatprep.subr.mxu0 0.0
  %1880 = vmatpush1.msra.mxu0 %v1789
  %1881 = vmatprep.subr.mxu0 0.0
  %1882 = vmatpush1.msra.mxu0 %v1790
  %1883 = vmatprep.subr.mxu0 0.0
  %1884 = vmatpush1.msra.mxu0 %v1791
  %1885 = vmatprep.subr.mxu0 0.0
  %1886 = vmatpush1.msra.mxu0 %v1792
  %1887 = vmatprep.subr.mxu0 0.0
  %1888 = vmatpush1.msra.mxu0 %v1793
  %1889 = vmatprep.subr.mxu0 0.0
  %1890 = vmatpush1.msra.mxu0 %v1794
  %1891 = vmatprep.subr.mxu0 0.0
  %1892 = vmatpush1.msra.mxu0 %v1795
  %1893 = vmatprep.subr.mxu0 0.0
  %1894 = vmatpush1.msra.mxu0 %v1796
  %1895 = vmatprep.subr.mxu0 0.0
  %1896 = vmatpush1.msra.mxu0 %v1797
  %1897 = vmatprep.subr.mxu0 0.0
  %1898 = vmatpush1.msra.mxu0 %v1798
  %1899 = vmatprep.subr.mxu0 0.0
  %1900 = vmatpush1.msra.mxu0 %v1799
  %1901 = vmatprep.subr.mxu0 0.0
  %1902 = vmatpush1.msra.mxu0 %v1800
  %1903 = vmatprep.subr.mxu0 0.0
  %1904 = vmatpush1.msra.mxu0 %v1801
  %1905 = vmatprep.subr.mxu0 0.0
  %1906 = vmatpush1.msra.mxu0 %v1802
  %1907 = vmatprep.subr.mxu0 0.0
  %1908 = vmatpush1.msra.mxu0 %v1803
  %1909 = vmatprep.subr.mxu0 0.0
  %1910 = vmatpush1.msra.mxu0 %v1804
  %1911 = vmatprep.subr.mxu0 0.0
  %1912 = vmatpush1.msra.mxu0 0.0
  %1913 = vmatprep.subr.mxu0 0.0
  %1914 = vmatpush1.msra.mxu0 0.0
  %1915 = vmatprep.subr.mxu0 0.0
  %1916 = vmatpush1.msra.mxu0 0.0
  %1917 = vmatprep.subr.mxu0 0.0
  %1918 = vmatpush1.msra.mxu0 0.0
  %1919 = vmatprep.subr.mxu0 0.0
  %1920 = vmatpush1.msra.mxu0 0.0
  %1921 = vmatprep.subr.mxu0 0.0
  %1922 = vmatpush1.msra.mxu0 0.0
  %1923 = vmatprep.subr.mxu0 0.0
  %1924 = vmatpush1.msra.mxu0 0.0
  %1925 = vmatprep.subr.mxu0 0.0
  %1926 = vmatpush1.msra.mxu0 0.0
  %1927 = vmatprep.subr.mxu0 0.0
  %1928 = vmatpush1.msra.mxu0 0.0
  %1929 = vmatprep.subr.mxu0 0.0
  %1930 = vmatpush1.msra.mxu0 0.0
  %1931 = vmatprep.subr.mxu0 0.0
  %1932 = vmatpush1.msra.mxu0 0.0
  %1933 = vmatprep.subr.mxu0 0.0
  %1934 = vmatpush1.msra.mxu0 0.0
  %1935 = vmatprep.subr.mxu0 0.0
  %1936 = vmatpush1.msra.mxu0 0.0
  %1937 = vmatprep.subr.mxu0 0.0
  %1938 = vmatpush1.msra.mxu0 0.0
  %1939 = vmatprep.subr.mxu0 0.0
  %1940 = vmatpush1.msra.mxu0 0.0
  %1941 = vmatprep.subr.mxu0 0.0
  %1942 = vmatpush1.msra.mxu0 0.0
  %1943 = vmatprep.mubr.f32.mxu0 0.0
  %1944 = vmatmul.mubr.f32.gmra.mrb[0].mxu0 %v1566
  %v1945 = vpop.f32.mrb[0].mxu0
  %v1946 = vadd.f32 %v1878, %v1945
  %v1947 = vpop.f32.mrb[0].mxu0
  %1948 = vdwg.mxu0
  %1949 = vst [vmem:[%s5] sm:$0xff] %v1946
  // Predicated region
  $region22: #{nn_forward.1} parent=0 // pred_check
    _
  $region23: #{nn_forward.1} parent=0 // pred_check_branch
    %1951 = sbr.rel (0) target = $region25
  $region24: #{nn_forward.1} parent=0 // pred_region
    _
  $region25: #{nn_forward.1} parent=0 // pred_fallthru
    _
  // Predicated region
  $region26: #{nn_forward.1} parent=0 // pred_check
    _
  $region27: #{nn_forward.1} parent=0 // pred_check_branch
    %1953 = sbr.rel (0) target = $region29
  $region28: #{nn_forward.1} parent=0 // pred_region
    _
  $region29: #{nn_forward.1} parent=0 // pred_fallthru
    _

</llo_original>
